<compile_context>
chip_gen: v7x
topology: tpu7x:2x2x1
jax: 0.10.0
libtpu: 0.0.40
codegen_flags: <defaults>
</compile_context>

<pallas_src>
import math
import functools

import jax
import jax.numpy as jnp
from jax.experimental import pallas as pl
from jax.experimental.pallas import tpu as pltpu


def _rmha_kernel(*refs, num_heads, d_k, add_rel_bias, approx_recip):
    """Fused RMHA forward for one (block_b, S, D) slab of the batch.

    refs = (x, w_qkv, wo3g[, bias], out)
      x     : (block_b, S, D)        activations (matmul dtype)
      w_qkv : (D, 3*D)               fused, pre-transposed, pre-scaled QKV proj
      wo3g  : (H*block_b, d_k, D)    pre-transposed out-proj, replicated per b
      bias  : (H, S, S)              relative bias (only when add_rel_bias)
      out   : (block_b, S, D)        float32 output
    """
    if add_rel_bias:
        x_ref, wqkv_ref, wo3g_ref, bias_ref, o_ref = refs
    else:
        x_ref, wqkv_ref, wo3g_ref, o_ref = refs
        bias_ref = None

    H = num_heads
    block_b, S, D = x_ref.shape
    G = H * block_b
    cdt = wqkv_ref.dtype                      # matmul operand dtype (f32/bf16)

    # Single fused QKV projection: one (block_b*S, D) @ (D, 3D) MXU pass with
    # f32 accumulation.  1/sqrt(d_k) is already folded into the Q columns.
    x2d = x_ref[...].reshape(block_b * S, D)  # leading-dim merge, lane untouched
    qkv = jnp.dot(x2d, wqkv_ref[...], preferred_element_type=jnp.float32)
    qkv = qkv.astype(cdt)                     # single cast (no-op for f32)

    # (block_b*S, 3D) -> (H*block_b, S, d_k), g = h*block_b + b.
    # Only static lane slices + leading-axis stack/reshape (layout-safe);
    # 3*H relayouts total, hoisted out of any per-batch loop.
    def split_heads(base):
        per_h = [
            qkv[:, base + h * d_k: base + (h + 1) * d_k].reshape(block_b, S, d_k)
            for h in range(H)
        ]
        return jnp.stack(per_h, axis=0).reshape(G, S, d_k)

    qh = split_heads(0)
    kh = split_heads(D)
    vh = split_heads(2 * D)

    # (h, b)-batched attention: single 3-D batched contractions.
    scores = jnp.einsum("gqd,gkd->gqk", qh, kh,
                        preferred_element_type=jnp.float32)        # (G, S, S)
    if add_rel_bias:
        bias = bias_ref[...]                                        # load once
        scores = scores + jnp.broadcast_to(
            bias[:, None], (H, block_b, S, S)).reshape(G, S, S)

    m = jnp.max(scores, axis=-1, keepdims=True)
    p = jnp.exp(scores - m)                                         # f32 softmax
    denom = jnp.sum(p, axis=-1, keepdims=True)
    w = p * pl.reciprocal(denom, approx=approx_recip)

    ctx = jnp.einsum("gqk,gkd->gqd", w.astype(cdt), vh,
                     preferred_element_type=jnp.float32)            # (G, S, d_k)

    # Output projection, still (h, b)-batched; the head-sum is a leading-axis
    # reduction (H-1 vector adds over a (block_b, S, D) slab).
    proj = jnp.einsum("gsd,gdo->gso", ctx.astype(cdt), wo3g_ref[...],
                      preferred_element_type=jnp.float32)           # (G, S, D)
    out = jnp.sum(proj.reshape(H, block_b, S, D), axis=0)           # (b, S, D)

    # TODO(synk): benchmark a lane-dense (block_b, S*D) output slab (unmasked
    # vst) against this (S, D=32) layout (masked vst); with only block_b*S*D
    # = 1024 output elements per step the in-kernel (S,D)->(S*D,) relayout is
    # the larger cost, so the natural layout is kept.
    o_ref[...] = out.astype(o_ref.dtype)


def relative_mha_forward(x, wq, wk, wv, wo, bias=None, *, num_heads,
                         add_rel_bias=False, block_b=None,
                         matmul_dtype=jnp.float32, approx_recip=False):
    """RelativeMultiHeadAttention forward.

    x: (B, S, D).  wq/wk/wv/wo: PyTorch nn.Linear layout (out_feat, in_feat).
    Default path == the module's F.scaled_dot_product_attention branch (the
    relative bias added to `scores` there is dead code); add_rel_bias=True
    reproduces the explicit-softmax branch (minus dropout).
    approx_recip=True opts into the EUP approximate reciprocal for the softmax
    denominator (perf; not bit-identical to exact division).
    """
    B, S, D = x.shape
    assert D % num_heads == 0, "d_model must be divisible by num_heads"
    H = num_heads
    d_k = D // H
    scale = 1.0 / math.sqrt(d_k)

    # Single grid step by default: at small shapes wall time is dominated by
    # per-step fixed overhead (~0.35 us/step), not MXU or HBM bandwidth.
    # Pass block_b < B explicitly (e.g. block_b=B//2) to benchmark the
    # two-TensorCore split on v7x against grid=(1,).
    if block_b is None:
        block_b = B
    assert B % block_b == 0, "block_b must divide batch"
    grid_b = B // block_b

    # Soft VMEM-scaling guard: scores/probs (and the optional bias) grow as
    # S^2; tile over the KV axis (flash-style online softmax) before raising
    # vmem_limit_bytes — v7x has 64 MiB physical / 32 MiB default scoped VMEM.
    vmem_est = (
        2 * 4 * (block_b * H * S * S)                       # scores + exp (f32)
        + 2 * 4 * (H * S * S) * int(add_rel_bias)           # double-buffered bias
        + 4 * 4 * 2 * (block_b * S * D)                     # x / qkv / ctx slabs
        + 2 * 4 * (D * 3 * D + block_b * H * d_k * D))      # weights (dbl-buf)
    assert vmem_est < 24 * 1024 * 1024, (
        "per-step footprint too large; tile over KV (flash-style) instead of "
        "raising vmem_limit_bytes")

    # Wrapper-side weight prep (one-time layout plumbing done by XLA):
    #  * fuse Q/K/V into one pre-transposed (D, 3D) matrix with 1/sqrt(d_k)
    #    folded into the Q columns -> y = x @ W_qkv.
    #  * pre-transpose Wo, split per head and replicate per batch element of a
    #    block: (H*block_b, d_k, D), so the in-kernel out-proj is one 3-D
    #    batched matmul (replication cost: block_b * 4 KB at D=32, negligible).
    w_qkv = jnp.concatenate([wq * scale, wk, wv], axis=0).T.astype(matmul_dtype)
    wo3g = jnp.broadcast_to(
        wo.T.reshape(H, 1, d_k, D), (H, block_b, d_k, D)
    ).reshape(H * block_b, d_k, D).astype(matmul_dtype)
    x_in = x.astype(matmul_dtype)

    kernel = functools.partial(
        _rmha_kernel, num_heads=H, d_k=d_k,
        add_rel_bias=add_rel_bias, approx_recip=approx_recip)

    in_specs = [
        pl.BlockSpec((block_b, S, D), lambda i: (i, 0, 0)),        # x slab
        pl.BlockSpec((D, 3 * D), lambda i: (0, 0)),                # fused W_qkv
        pl.BlockSpec((H * block_b, d_k, D), lambda i: (0, 0, 0)),  # out-proj
    ]
    args = [x_in, w_qkv, wo3g]
    if add_rel_bias:
        # Only DMA the (H, S, S) bias when the kernel actually uses it.
        in_specs.append(pl.BlockSpec((H, S, S), lambda i: (0, 0, 0)))
        args.append(bias.astype(jnp.float32))

    return pl.pallas_call(
        kernel,
        out_shape=jax.ShapeDtypeStruct((B, S, D), jnp.float32),
        grid=(grid_b,),
        in_specs=in_specs,
        out_specs=pl.BlockSpec((block_b, S, D), lambda i: (i, 0, 0)),
        compiler_params=pltpu.CompilerParams(
            dimension_semantics=("parallel",)),
    )(*args)


def _reference_forward(x, wq, wk, wv, wo, num_heads, bias=None):
    # Pure-JAX reference of the PyTorch forward (SDPA branch when bias is None,
    # the explicit-softmax branch with bias otherwise; no dropout).
    B, S, D = x.shape
    d_k = D // num_heads
    q = (x @ wq.T).reshape(B, S, num_heads, d_k).transpose(0, 2, 1, 3)
    k = (x @ wk.T).reshape(B, S, num_heads, d_k).transpose(0, 2, 1, 3)
    v = (x @ wv.T).reshape(B, S, num_heads, d_k).transpose(0, 2, 1, 3)
    scores = jnp.einsum("bhqd,bhkd->bhqk", q, k) / math.sqrt(d_k)
    if bias is not None:
        scores = scores + bias[None]
    w = jax.nn.softmax(scores, axis=-1)
    out = jnp.einsum("bhqk,bhkd->bhqd", w, v)
    out = out.transpose(0, 2, 1, 3).reshape(B, S, D)
    return out @ wo.T


if __name__ == "__main__":
    # Shapes implied by the module: d_model=32, num_heads=4 (d_k=8),
    # token_coords = 4x4 spatial grid -> S=16, batch B=2, max_distance=8.
    B, grid_hw, num_heads, d_model, max_distance = 2, 4, 4, 32, 8
    S = grid_hw * grid_hw

    key = jax.random.PRNGKey(0)
    k_x, k_wq, k_wk, k_wv, k_wo, k_rb = jax.random.split(key, 6)

    x = jax.random.normal(k_x, (B, S, d_model), dtype=jnp.float32)

    # Deterministic "Linear" weights, PyTorch (out_features, in_features) layout.
    w_scale = 1.0 / math.sqrt(d_model)
    wq = jax.random.normal(k_wq, (d_model, d_model), dtype=jnp.float32) * w_scale
    wk = jax.random.normal(k_wk, (d_model, d_model), dtype=jnp.float32) * w_scale
    wv = jax.random.normal(k_wv, (d_model, d_model), dtype=jnp.float32) * w_scale
    wo = jax.random.normal(k_wo, (d_model, d_model), dtype=jnp.float32) * w_scale

    # token_coords: 4x4 grid of (row, col) integer coordinates.
    ii, jj = jnp.meshgrid(jnp.arange(grid_hw), jnp.arange(grid_hw), indexing="ij")
    coords = jnp.stack([ii.ravel(), jj.ravel()], axis=-1)             # (S, 2)

    # _precompute_rel_idx + rel_bias gather (module glue, plain JAX wrapper-side).
    diff = coords[:, None, :] - coords[None, :, :]
    diff = jnp.clip(diff, -max_distance, max_distance) + max_distance
    rel_idx = diff[..., 0] * (2 * max_distance + 1) + diff[..., 1]    # (S, S)

    num_rel = (2 * max_distance + 1) ** 2
    rel_bias = (jax.random.normal(k_rb, (num_rel, num_heads), dtype=jnp.float32)
                * max_distance ** (-0.5))
    bias = jnp.transpose(rel_bias[rel_idx], (2, 0, 1))                # (H, S, S)

    ref = _reference_forward(x, wq, wk, wv, wo, num_heads)

    # 1) Default path: exact f32, single grid step (block_b = B).
    out_exact = jax.block_until_ready(
        relative_mha_forward(x, wq, wk, wv, wo, num_heads=num_heads))
    assert out_exact.shape == (B, S, d_model)
    assert jnp.allclose(out_exact, ref, atol=1e-4, rtol=1e-4), "exact path mismatch"

    # 2) Perf opt-in: approximate reciprocal on the EUP.
    out_fast = jax.block_until_ready(
        relative_mha_forward(x, wq, wk, wv, wo, num_heads=num_heads,
                             approx_recip=True))
    assert jnp.allclose(out_fast, ref, atol=2e-2, rtol=2e-2), "approx path mismatch"

    # 3) bf16 matmul operands (optional; f32 accumulation and f32 softmax math).
    out_bf16 = jax.block_until_ready(
        relative_mha_forward(x, wq, wk, wv, wo, num_heads=num_heads,
                             matmul_dtype=jnp.bfloat16))
    assert jnp.allclose(out_bf16, ref, atol=1.5e-1, rtol=1.5e-1), "bf16 path mismatch"

    # 4) Batch split across grid steps (block_b=1 -> grid=(2,)); the v7x
    #    two-TensorCore benchmark configuration.
    out_split = jax.block_until_ready(
        relative_mha_forward(x, wq, wk, wv, wo, num_heads=num_heads, block_b=1))
    assert jnp.allclose(out_split, ref, atol=1e-4, rtol=1e-4), "split-grid mismatch"

    # 5) Relative-bias branch (the module's non-SDPA path), validated separately.
    ref_bias = _reference_forward(x, wq, wk, wv, wo, num_heads, bias=bias)
    out_bias = jax.block_until_ready(
        relative_mha_forward(x, wq, wk, wv, wo, bias=bias, num_heads=num_heads,
                             add_rel_bias=True))
    assert jnp.allclose(out_bias, ref_bias, atol=1e-4, rtol=1e-4), "bias path mismatch"

    print("KERNEL_OK")
</pallas_src>

<mosaic_0001>
module attributes {stable_mosaic.version = 11 : i64} {
  func.func @_rmha_kernel(%arg0: i32, %arg1: memref<2x16x32xf32, #tpu.memory_space<vmem>>, %arg2: memref<32x96xf32, #tpu.memory_space<vmem>>, %arg3: memref<8x8x32xf32, #tpu.memory_space<vmem>>, %arg4: memref<2x16x32xf32, #tpu.memory_space<vmem>>) attributes {dimension_semantics = [#tpu.dimension_semantics<parallel>], iteration_bounds = array<i64: 1>, scalar_prefetch = 0 : i64, scratch_operands = 0 : i64, tpu.core_type = #tpu.core_type<tc>, window_params = [{transform_indices = @transform_0, window_bounds = array<i64: 2, 16, 32>}, {pipeline_mode = #tpu.pipeline_mode<synchronous>, transform_indices = @transform_1, window_bounds = array<i64: 32, 96>}, {pipeline_mode = #tpu.pipeline_mode<synchronous>, transform_indices = @transform_2, window_bounds = array<i64: 8, 8, 32>}, {transform_indices = @transform_3, window_bounds = array<i64: 2, 16, 32>}]} {
    %c0 = arith.constant 0 : index
    %c0_0 = arith.constant 0 : index
    %c0_1 = arith.constant 0 : index
    %0 = vector.load %arg1[%c0, %c0_0, %c0_1] : memref<2x16x32xf32, #tpu.memory_space<vmem>>, vector<2x16x32xf32>
    %1 = vector.shape_cast %0 : vector<2x16x32xf32> to vector<32x32xf32>
    %c0_2 = arith.constant 0 : index
    %c0_3 = arith.constant 0 : index
    %2 = vector.load %arg2[%c0_2, %c0_3] : memref<32x96xf32, #tpu.memory_space<vmem>>, vector<32x96xf32>
    %cst = arith.constant dense<0.000000e+00> : vector<32x96xf32>
    %3 = tpu.matmul %1, %2, %cst {dimension_numbers = #tpu.dot_dimension_numbers<[1], [0], [0], [1], [0, 0, 1, 1], [], []>} : vector<32x32xf32>, vector<32x96xf32>, vector<32x96xf32> -> vector<32x96xf32>
    %4 = vector.extract_strided_slice %3 {offsets = [0, 0], sizes = [32, 8], strides = [1, 1]} : vector<32x96xf32> to vector<32x8xf32>
    %5 = vector.shape_cast %4 : vector<32x8xf32> to vector<2x16x8xf32>
    %6 = vector.extract_strided_slice %3 {offsets = [0, 8], sizes = [32, 8], strides = [1, 1]} : vector<32x96xf32> to vector<32x8xf32>
    %7 = vector.shape_cast %6 : vector<32x8xf32> to vector<2x16x8xf32>
    %8 = vector.extract_strided_slice %3 {offsets = [0, 16], sizes = [32, 8], strides = [1, 1]} : vector<32x96xf32> to vector<32x8xf32>
    %9 = vector.shape_cast %8 : vector<32x8xf32> to vector<2x16x8xf32>
    %10 = vector.extract_strided_slice %3 {offsets = [0, 24], sizes = [32, 8], strides = [1, 1]} : vector<32x96xf32> to vector<32x8xf32>
    %11 = vector.shape_cast %10 : vector<32x8xf32> to vector<2x16x8xf32>
    %12 = vector.shape_cast %5 : vector<2x16x8xf32> to vector<1x2x16x8xf32>
    %13 = vector.shape_cast %7 : vector<2x16x8xf32> to vector<1x2x16x8xf32>
    %14 = vector.shape_cast %9 : vector<2x16x8xf32> to vector<1x2x16x8xf32>
    %15 = vector.shape_cast %11 : vector<2x16x8xf32> to vector<1x2x16x8xf32>
    %16 = tpu.concatenate %12, %13, %14, %15 in 0 : vector<1x2x16x8xf32>, vector<1x2x16x8xf32>, vector<1x2x16x8xf32>, vector<1x2x16x8xf32> -> vector<4x2x16x8xf32>
    %17 = vector.shape_cast %16 : vector<4x2x16x8xf32> to vector<8x16x8xf32>
    %18 = vector.extract_strided_slice %3 {offsets = [0, 32], sizes = [32, 8], strides = [1, 1]} : vector<32x96xf32> to vector<32x8xf32>
    %19 = vector.shape_cast %18 : vector<32x8xf32> to vector<2x16x8xf32>
    %20 = vector.extract_strided_slice %3 {offsets = [0, 40], sizes = [32, 8], strides = [1, 1]} : vector<32x96xf32> to vector<32x8xf32>
    %21 = vector.shape_cast %20 : vector<32x8xf32> to vector<2x16x8xf32>
    %22 = vector.extract_strided_slice %3 {offsets = [0, 48], sizes = [32, 8], strides = [1, 1]} : vector<32x96xf32> to vector<32x8xf32>
    %23 = vector.shape_cast %22 : vector<32x8xf32> to vector<2x16x8xf32>
    %24 = vector.extract_strided_slice %3 {offsets = [0, 56], sizes = [32, 8], strides = [1, 1]} : vector<32x96xf32> to vector<32x8xf32>
    %25 = vector.shape_cast %24 : vector<32x8xf32> to vector<2x16x8xf32>
    %26 = vector.shape_cast %19 : vector<2x16x8xf32> to vector<1x2x16x8xf32>
    %27 = vector.shape_cast %21 : vector<2x16x8xf32> to vector<1x2x16x8xf32>
    %28 = vector.shape_cast %23 : vector<2x16x8xf32> to vector<1x2x16x8xf32>
    %29 = vector.shape_cast %25 : vector<2x16x8xf32> to vector<1x2x16x8xf32>
    %30 = tpu.concatenate %26, %27, %28, %29 in 0 : vector<1x2x16x8xf32>, vector<1x2x16x8xf32>, vector<1x2x16x8xf32>, vector<1x2x16x8xf32> -> vector<4x2x16x8xf32>
    %31 = vector.shape_cast %30 : vector<4x2x16x8xf32> to vector<8x16x8xf32>
    %32 = vector.extract_strided_slice %3 {offsets = [0, 64], sizes = [32, 8], strides = [1, 1]} : vector<32x96xf32> to vector<32x8xf32>
    %33 = vector.shape_cast %32 : vector<32x8xf32> to vector<2x16x8xf32>
    %34 = vector.extract_strided_slice %3 {offsets = [0, 72], sizes = [32, 8], strides = [1, 1]} : vector<32x96xf32> to vector<32x8xf32>
    %35 = vector.shape_cast %34 : vector<32x8xf32> to vector<2x16x8xf32>
    %36 = vector.extract_strided_slice %3 {offsets = [0, 80], sizes = [32, 8], strides = [1, 1]} : vector<32x96xf32> to vector<32x8xf32>
    %37 = vector.shape_cast %36 : vector<32x8xf32> to vector<2x16x8xf32>
    %38 = vector.extract_strided_slice %3 {offsets = [0, 88], sizes = [32, 8], strides = [1, 1]} : vector<32x96xf32> to vector<32x8xf32>
    %39 = vector.shape_cast %38 : vector<32x8xf32> to vector<2x16x8xf32>
    %40 = vector.shape_cast %33 : vector<2x16x8xf32> to vector<1x2x16x8xf32>
    %41 = vector.shape_cast %35 : vector<2x16x8xf32> to vector<1x2x16x8xf32>
    %42 = vector.shape_cast %37 : vector<2x16x8xf32> to vector<1x2x16x8xf32>
    %43 = vector.shape_cast %39 : vector<2x16x8xf32> to vector<1x2x16x8xf32>
    %44 = tpu.concatenate %40, %41, %42, %43 in 0 : vector<1x2x16x8xf32>, vector<1x2x16x8xf32>, vector<1x2x16x8xf32>, vector<1x2x16x8xf32> -> vector<4x2x16x8xf32>
    %45 = vector.shape_cast %44 : vector<4x2x16x8xf32> to vector<8x16x8xf32>
    "tpu.trace_start"() <{level = 10 : i32, message = "gqd,gkd->gqk"}> : () -> ()
    %cst_4 = arith.constant dense<0.000000e+00> : vector<8x16x16xf32>
    %46 = tpu.matmul %17, %31, %cst_4 {dimension_numbers = #tpu.dot_dimension_numbers<[2], [2], [1], [1], [0, 0, 0, 1, 1, 1], [0], [0]>} : vector<8x16x8xf32>, vector<8x16x8xf32>, vector<8x16x16xf32> -> vector<8x16x16xf32>
    "tpu.trace_stop"() : () -> ()
    %cst_5 = arith.constant dense<0xFF800000> : vector<8x16xf32>
    %47 = vector.multi_reduction <maximumf>, %46, %cst_5 [2] : vector<8x16x16xf32> to vector<8x16xf32>
    %48 = vector.shape_cast %47 : vector<8x16xf32> to vector<8x16x1xf32>
    %49 = vector.broadcast %48 : vector<8x16x1xf32> to vector<8x16x16xf32>
    %50 = arith.subf %46, %49 : vector<8x16x16xf32>
    %51 = math.exp %50 : vector<8x16x16xf32>
    %cst_6 = arith.constant dense<0.000000e+00> : vector<8x16xf32>
    %52 = vector.multi_reduction <add>, %51, %cst_6 [2] : vector<8x16x16xf32> to vector<8x16xf32>
    %53 = vector.shape_cast %52 : vector<8x16xf32> to vector<8x16x1xf32>
    %54 = tpu.reciprocal %53 : vector<8x16x1xf32> -> vector<8x16x1xf32>
    %55 = vector.broadcast %54 : vector<8x16x1xf32> to vector<8x16x16xf32>
    %56 = arith.mulf %51, %55 : vector<8x16x16xf32>
    "tpu.trace_start"() <{level = 10 : i32, message = "gqk,gkd->gqd"}> : () -> ()
    %cst_7 = arith.constant dense<0.000000e+00> : vector<8x16x8xf32>
    %57 = tpu.matmul %56, %45, %cst_7 {dimension_numbers = #tpu.dot_dimension_numbers<[2], [1], [1], [2], [0, 0, 0, 1, 1, 2], [0], [0]>} : vector<8x16x16xf32>, vector<8x16x8xf32>, vector<8x16x8xf32> -> vector<8x16x8xf32>
    "tpu.trace_stop"() : () -> ()
    %c0_8 = arith.constant 0 : index
    %c0_9 = arith.constant 0 : index
    %c0_10 = arith.constant 0 : index
    %58 = vector.load %arg3[%c0_8, %c0_9, %c0_10] : memref<8x8x32xf32, #tpu.memory_space<vmem>>, vector<8x8x32xf32>
    "tpu.trace_start"() <{level = 10 : i32, message = "gsd,gdo->gso"}> : () -> ()
    %cst_11 = arith.constant dense<0.000000e+00> : vector<8x16x32xf32>
    %59 = tpu.matmul %57, %58, %cst_11 {dimension_numbers = #tpu.dot_dimension_numbers<[2], [1], [1], [2], [0, 0, 0, 1, 1, 2], [0], [0]>} : vector<8x16x8xf32>, vector<8x8x32xf32>, vector<8x16x32xf32> -> vector<8x16x32xf32>
    "tpu.trace_stop"() : () -> ()
    %60 = vector.shape_cast %59 : vector<8x16x32xf32> to vector<4x2x16x32xf32>
    %cst_12 = arith.constant dense<0.000000e+00> : vector<2x16x32xf32>
    %61 = vector.multi_reduction <add>, %60, %cst_12 [0] : vector<4x2x16x32xf32> to vector<2x16x32xf32>
    %c0_13 = arith.constant 0 : index
    %c0_14 = arith.constant 0 : index
    %c0_15 = arith.constant 0 : index
    %62 = vector.load %arg4[%c0_13, %c0_14, %c0_15] : memref<2x16x32xf32, #tpu.memory_space<vmem>>, vector<2x16x32xf32>
    tpu.vector_store %arg4[%c0_13, %c0_14, %c0_15], %61 {strides = array<i32>} : memref<2x16x32xf32, #tpu.memory_space<vmem>>, vector<2x16x32xf32>,
    return
  }
  func.func @transform_0(%arg0: i32) -> (i32, i32, i32) {
    %c0_i32 = arith.constant 0 : i32
    %c0_i32_0 = arith.constant 0 : i32
    %c0_i32_1 = arith.constant 0 : i32
    return %arg0, %c0_i32, %c0_i32_0 : i32, i32, i32
  }
  func.func @transform_1(%arg0: i32) -> (i32, i32) {
    %c0_i32 = arith.constant 0 : i32
    %c0_i32_0 = arith.constant 0 : i32
    %c0_i32_1 = arith.constant 0 : i32
    return %c0_i32, %c0_i32_0 : i32, i32
  }
  func.func @transform_2(%arg0: i32) -> (i32, i32, i32) {
    %c0_i32 = arith.constant 0 : i32
    %c0_i32_0 = arith.constant 0 : i32
    %c0_i32_1 = arith.constant 0 : i32
    %c0_i32_2 = arith.constant 0 : i32
    return %c0_i32, %c0_i32_0, %c0_i32_1 : i32, i32, i32
  }
  func.func @transform_3(%arg0: i32) -> (i32, i32, i32) {
    %c0_i32 = arith.constant 0 : i32
    %c0_i32_0 = arith.constant 0 : i32
    %c0_i32_1 = arith.constant 0 : i32
    return %arg0, %c0_i32, %c0_i32_0 : i32, i32, i32
  }
}

</mosaic_0001>

<llo_original>
// kernel: tpu_custom_call.1
$region0: #{tpu_custom_call.1}
  #allocation0 [shape = 'u32[]', space=smem, size = 0x4, offset = 0x4, fixed_abs, tag = 'smem constant byte address 0x4 - core index']
  #allocation1 [shape = 'u32[144,128]{1,0:T(1,128)}', space=vmem, size = 0x12000, scoped, tag = 'internal scratch']
  %s0 = inlined_call_operand.hbm [shape: f32[2,16,32], index: 0, kind: input, shape index: {}]
  %s1 = inlined_call_operand.hbm [shape: f32[32,96], index: 1, kind: input, shape index: {}]
  %s2 = inlined_call_operand.hbm [shape: f32[8,8,32], index: 2, kind: input, shape index: {}]
  %s3 = inlined_call_operand.hbm [shape: f32[2,16,32], index: 3, kind: output, shape index: {}]
  %s4 = sld [smem:[#allocation0]]
  $region34: #{tpu_custom_call.1} parent=0
    _
  %s6 = ssub.s32 1, %s4
  %s7 = scalar_select 0, %s6, %s4
  $region1: #{tpu_custom_call.1} parent=0
    #allocation2 [shape = 'u8[16384]{0}', space=vmem, size = 0x4000, scoped, tag = 'input window, operand 0, single buffered']
    #allocation3 [shape = 's32[1]{0}', space=sflag, size = 0x4, scoped, tag = 'scoped memory for tpu_custom_call.1']
    #allocation4 [shape = 's32[1]{0}', space=sflag, size = 0x4, scoped, tag = 'scoped memory for tpu_custom_call.1']
    #allocation5 [shape = 'u8[16384]{0}', space=vmem, size = 0x4000, scoped, tag = 'input window, operand 1, single buffered']
    #allocation6 [shape = 's32[1]{0}', space=sflag, size = 0x4, scoped, tag = 'scoped memory for tpu_custom_call.1']
    #allocation7 [shape = 'u8[32768]{0}', space=vmem, size = 0x8000, scoped, tag = 'input window, operand 2, single buffered']
    #allocation8 [shape = 'u8[16384]{0}', space=vmem, size = 0x4000, scoped, tag = 'output window, operand 0, single buffered']
    %8 = vsyncpa [#allocation3], 0
    %9 = vsyncpa [#allocation6], 0
    %10 = vsyncpa [#allocation4], 0
    // Predicated region
    $region2: #{tpu_custom_call.1} parent=1 // pred_check
      _
    $region3: #{tpu_custom_call.1} parent=1 // pred_check_branch
      %12 = sbr.rel (0) target = $region5
    $region4: #{tpu_custom_call.1} parent=1 // pred_region
      %s14 = ssub.s32 512, 512
      %15 = vsyncadd [#allocation3], %s14
      %s16 = sshll.u32 [#allocation2], 4
      %s17 = int_to_ptr.vmem [resolvable:$true] %s16
      %22 = dma.hbm_to_vmem [thread:$0]  %s0, 512, %s17, [#allocation3], 128, 128, 8
    $region5: #{tpu_custom_call.1} parent=1 // pred_fallthru
      _
    // Predicated region
    $region6: #{tpu_custom_call.1} parent=1 // pred_check
      _
    $region7: #{tpu_custom_call.1} parent=1 // pred_check_branch
      %24 = sbr.rel (0) target = $region9
    $region8: #{tpu_custom_call.1} parent=1 // pred_region
      %s26 = ssub.s32 512, 512
      %27 = vsyncadd [#allocation6], %s26
      %s28 = sshll.u32 [#allocation5], 4
      %s29 = int_to_ptr.vmem [resolvable:$true] %s28
      %34 = dma.hbm_to_vmem [thread:$0]  %s1, 512, %s29, [#allocation6], 128, 128, 8
    $region9: #{tpu_custom_call.1} parent=1 // pred_fallthru
      _
    // Predicated region
    $region10: #{tpu_custom_call.1} parent=1 // pred_check
      _
    $region11: #{tpu_custom_call.1} parent=1 // pred_check_branch
      %36 = sbr.rel (0) target = $region13
    $region12: #{tpu_custom_call.1} parent=1 // pred_region
      %s38 = ssub.s32 1024, 1024
      %39 = vsyncadd [#allocation6], %s38
      %s40 = sshll.u32 [#allocation7], 4
      %s41 = int_to_ptr.vmem [resolvable:$true] %s40
      %46 = dma.hbm_to_vmem [thread:$0]  %s2, 1024, %s41, [#allocation6], 128, 128, 8
    $region13: #{tpu_custom_call.1} parent=1 // pred_fallthru
      _
    // Predicated region
    $region14: #{tpu_custom_call.1} parent=1 // pred_check
      _
    $region15: #{tpu_custom_call.1} parent=1 // pred_check_branch
      %48 = sbr.rel (0) target = $region17
    $region16: #{tpu_custom_call.1} parent=1 // pred_region
      %49 = dma.done [#allocation3], 512
    $region17: #{tpu_custom_call.1} parent=1 // pred_fallthru
      _
    // Predicated region
    $region18: #{tpu_custom_call.1} parent=1 // pred_check
      _
    $region19: #{tpu_custom_call.1} parent=1 // pred_check_branch
      %51 = sbr.rel (0) target = $region21
    $region20: #{tpu_custom_call.1} parent=1 // pred_region
      %52 = dma.done [#allocation6], 512
    $region21: #{tpu_custom_call.1} parent=1 // pred_fallthru
      _
    // Predicated region
    $region22: #{tpu_custom_call.1} parent=1 // pred_check
      _
    $region23: #{tpu_custom_call.1} parent=1 // pred_check_branch
      %54 = sbr.rel (0) target = $region25
    $region24: #{tpu_custom_call.1} parent=1 // pred_region
      %55 = dma.done [#allocation6], 1024
    $region25: #{tpu_custom_call.1} parent=1 // pred_fallthru
      _
    %v56 = vld [vmem:[#allocation2] sm:$0xff]
    %v57 = vld [vmem:[#allocation2 + $0x8] sm:$0xff]
    %v58 = vld [vmem:[#allocation2 + $0x10] sm:$0xff]
    %v59 = vld [vmem:[#allocation2 + $0x18] sm:$0xff]
    %v60 = vld [vmem:[#allocation5] sm:$0xff]
    %v61 = vld [vmem:[#allocation5 + $0x8] sm:$0xff]
    %v62 = vld [vmem:[#allocation5 + $0x10] sm:$0xff]
    %v63 = vld [vmem:[#allocation5 + $0x18] sm:$0xff]
    %vm64 = vcmask 261120
    %v66 = vsel %vm64, %v56, 0
    %v69 = vsel %vm64, %v57, 0
    %v72 = vsel %vm64, %v58, 0
    %v75 = vsel %vm64, %v59, 0
    %77 = vmatprep.subr.mxu0 0.0
    %78 = vmatpush1.msra.mxu0 %v60
    %79 = vmatprep.subr.mxu0 0.0
    %80 = vmatpush1.msra.mxu0 %v61
    %81 = vmatprep.subr.mxu0 0.0
    %82 = vmatpush1.msra.mxu0 %v62
    %83 = vmatprep.subr.mxu0 0.0
    %84 = vmatpush1.msra.mxu0 %v63
    %85 = vmatprep.subr.mxu0 0.0
    %86 = vmatpush1.msra.mxu0 0.0
    %87 = vmatprep.subr.mxu0 0.0
    %88 = vmatpush1.msra.mxu0 0.0
    %89 = vmatprep.subr.mxu0 0.0
    %90 = vmatpush1.msra.mxu0 0.0
    %91 = vmatprep.subr.mxu0 0.0
    %92 = vmatpush1.msra.mxu0 0.0
    %93 = vmatprep.subr.mxu0 0.0
    %94 = vmatpush1.msra.mxu0 0.0
    %95 = vmatprep.subr.mxu0 0.0
    %96 = vmatpush1.msra.mxu0 0.0
    %97 = vmatprep.subr.mxu0 0.0
    %98 = vmatpush1.msra.mxu0 0.0
    %99 = vmatprep.subr.mxu0 0.0
    %100 = vmatpush1.msra.mxu0 0.0
    %101 = vmatprep.subr.mxu0 0.0
    %102 = vmatpush1.msra.mxu0 0.0
    %103 = vmatprep.subr.mxu0 0.0
    %104 = vmatpush1.msra.mxu0 0.0
    %105 = vmatprep.subr.mxu0 0.0
    %106 = vmatpush1.msra.mxu0 0.0
    %107 = vmatprep.subr.mxu0 0.0
    %108 = vmatpush1.msra.mxu0 0.0
    %109 = vmatprep.subr.mxu0 0.0
    %110 = vmatpush1.msra.mxu0 0.0
    %111 = vmatprep.subr.mxu0 0.0
    %112 = vmatpush1.msra.mxu0 0.0
    %113 = vmatprep.subr.mxu0 0.0
    %114 = vmatpush1.msra.mxu0 0.0
    %115 = vmatprep.subr.mxu0 0.0
    %116 = vmatpush1.msra.mxu0 0.0
    %117 = vmatprep.subr.mxu0 0.0
    %118 = vmatpush1.msra.mxu0 0.0
    %119 = vmatprep.subr.mxu0 0.0
    %120 = vmatpush1.msra.mxu0 0.0
    %121 = vmatprep.subr.mxu0 0.0
    %122 = vmatpush1.msra.mxu0 0.0
    %123 = vmatprep.subr.mxu0 0.0
    %124 = vmatpush1.msra.mxu0 0.0
    %125 = vmatprep.subr.mxu0 0.0
    %126 = vmatpush1.msra.mxu0 0.0
    %127 = vmatprep.subr.mxu0 0.0
    %128 = vmatpush1.msra.mxu0 0.0
    %129 = vmatprep.subr.mxu0 0.0
    %130 = vmatpush1.msra.mxu0 0.0
    %131 = vmatprep.subr.mxu0 0.0
    %132 = vmatpush1.msra.mxu0 0.0
    %133 = vmatprep.subr.mxu0 0.0
    %134 = vmatpush1.msra.mxu0 0.0
    %135 = vmatprep.subr.mxu0 0.0
    %136 = vmatpush1.msra.mxu0 0.0
    %137 = vmatprep.subr.mxu0 0.0
    %138 = vmatpush1.msra.mxu0 0.0
    %139 = vmatprep.subr.mxu0 0.0
    %140 = vmatpush1.msra.mxu0 0.0
    %141 = vmatprep.mubr.f32.mxu0 0.0
    %142 = vmatmul.mubr.f32.gmra.mrb[0].mxu0 %v66
    %v143 = vpop.f32.mrb[0].mxu0
    %v144 = vadd.f32 0.0, %v143
    %v145 = vpop.f32.mrb[0].mxu0
    %146 = vmatprep.mubr.f32.mxu0 0.0
    %147 = vmatmul.mubr.f32.gmra.mrb[0].mxu0 %v69
    %v148 = vpop.f32.mrb[0].mxu0
    %v149 = vadd.f32 0.0, %v148
    %v150 = vpop.f32.mrb[0].mxu0
    %151 = vmatprep.mubr.f32.mxu0 0.0
    %152 = vmatmul.mubr.f32.gmra.mrb[0].mxu0 %v72
    %v153 = vpop.f32.mrb[0].mxu0
    %v154 = vadd.f32 0.0, %v153
    %v155 = vpop.f32.mrb[0].mxu0
    %156 = vmatprep.mubr.f32.mxu0 0.0
    %157 = vmatmul.mubr.f32.gmra.mrb[0].mxu0 %v75
    %v158 = vpop.f32.mrb[0].mxu0
    %v159 = vadd.f32 0.0, %v158
    %v160 = vpop.f32.mrb[0].mxu0
    %161 = vdwg.mxu0
    %166 = vrot.lane.b32.xlu0 %v144, 120
    %v167 = vpop.permute.xlu0 %166
    %168 = vrot.lane.b32.xlu0 %v149, 120
    %v169 = vpop.permute.xlu0 %168
    %170 = vrot.lane.b32.xlu0 %v154, 120
    %v171 = vpop.permute.xlu0 %170
    %172 = vrot.lane.b32.xlu0 %v159, 120
    %v173 = vpop.permute.xlu0 %172
    %174 = vrot.lane.b32.xlu0 %v144, 112
    %v175 = vpop.permute.xlu0 %174
    %176 = vrot.lane.b32.xlu0 %v149, 112
    %v177 = vpop.permute.xlu0 %176
    %178 = vrot.lane.b32.xlu0 %v154, 112
    %v179 = vpop.permute.xlu0 %178
    %180 = vrot.lane.b32.xlu0 %v159, 112
    %v181 = vpop.permute.xlu0 %180
    %182 = vrot.lane.b32.xlu0 %v144, 104
    %v183 = vpop.permute.xlu0 %182
    %184 = vrot.lane.b32.xlu0 %v149, 104
    %v185 = vpop.permute.xlu0 %184
    %186 = vrot.lane.b32.xlu0 %v154, 104
    %v187 = vpop.permute.xlu0 %186
    %188 = vrot.lane.b32.xlu0 %v159, 104
    %v189 = vpop.permute.xlu0 %188
    %190 = vrot.lane.b32.xlu0 %v144, 96
    %v191 = vpop.permute.xlu0 %190
    %192 = vrot.lane.b32.xlu0 %v149, 96
    %v193 = vpop.permute.xlu0 %192
    %vm194 = vcmask 64512
    %v195 = vsel %vm194, %v144, 0
    %v197 = vsel %vm194, %v149, 0
    %v199 = vsel %vm194, %v191, 0
    %v201 = vsel %vm194, %v193, 0
    %203 = vmatprep.subr.mxu0 0.0
    %204 = vmatpush1.xpose.msra.mxu0 %v199
    %205 = vmatprep.subr.mxu0 0.0
    %206 = vmatpush1.xpose.msra.mxu0 %v201
    %207 = vmatprep.subr.mxu0 0.0
    %208 = vmatpush1.xpose.msra.mxu0 0.0
    %209 = vmatprep.subr.mxu0 0.0
    %210 = vmatpush1.xpose.msra.mxu0 0.0
    %211 = vmatprep.subr.mxu0 0.0
    %212 = vmatpush1.xpose.msra.mxu0 0.0
    %213 = vmatprep.subr.mxu0 0.0
    %214 = vmatpush1.xpose.msra.mxu0 0.0
    %215 = vmatprep.subr.mxu0 0.0
    %216 = vmatpush1.xpose.msra.mxu0 0.0
    %217 = vmatprep.subr.mxu0 0.0
    %218 = vmatpush1.xpose.msra.mxu0 0.0
    %219 = vmatprep.subr.mxu0 0.0
    %220 = vmatpush1.xpose.msra.mxu0 0.0
    %221 = vmatprep.subr.mxu0 0.0
    %222 = vmatpush1.xpose.msra.mxu0 0.0
    %223 = vmatprep.subr.mxu0 0.0
    %224 = vmatpush1.xpose.msra.mxu0 0.0
    %225 = vmatprep.subr.mxu0 0.0
    %226 = vmatpush1.xpose.msra.mxu0 0.0
    %227 = vmatprep.subr.mxu0 0.0
    %228 = vmatpush1.xpose.msra.mxu0 0.0
    %229 = vmatprep.subr.mxu0 0.0
    %230 = vmatpush1.xpose.msra.mxu0 0.0
    %231 = vmatprep.subr.mxu0 0.0
    %232 = vmatpush1.xpose.msra.mxu0 0.0
    %233 = vmatprep.subr.mxu0 0.0
    %234 = vmatpush1.xpose.msra.mxu0 0.0
    %235 = vmatprep.subr.mxu0 0.0
    %236 = vmatpush1.xpose.msra.mxu0 0.0
    %237 = vmatprep.subr.mxu0 0.0
    %238 = vmatpush1.xpose.msra.mxu0 0.0
    %239 = vmatprep.subr.mxu0 0.0
    %240 = vmatpush1.xpose.msra.mxu0 0.0
    %241 = vmatprep.subr.mxu0 0.0
    %242 = vmatpush1.xpose.msra.mxu0 0.0
    %243 = vmatprep.subr.mxu0 0.0
    %244 = vmatpush1.xpose.msra.mxu0 0.0
    %245 = vmatprep.subr.mxu0 0.0
    %246 = vmatpush1.xpose.msra.mxu0 0.0
    %247 = vmatprep.subr.mxu0 0.0
    %248 = vmatpush1.xpose.msra.mxu0 0.0
    %249 = vmatprep.subr.mxu0 0.0
    %250 = vmatpush1.xpose.msra.mxu0 0.0
    %251 = vmatprep.subr.mxu0 0.0
    %252 = vmatpush1.xpose.msra.mxu0 0.0
    %253 = vmatprep.subr.mxu0 0.0
    %254 = vmatpush1.xpose.msra.mxu0 0.0
    %255 = vmatprep.subr.mxu0 0.0
    %256 = vmatpush1.xpose.msra.mxu0 0.0
    %257 = vmatprep.subr.mxu0 0.0
    %258 = vmatpush1.xpose.msra.mxu0 0.0
    %259 = vmatprep.subr.mxu0 0.0
    %260 = vmatpush1.xpose.msra.mxu0 0.0
    %261 = vmatprep.subr.mxu0 0.0
    %262 = vmatpush1.xpose.msra.mxu0 0.0
    %263 = vmatprep.subr.mxu0 0.0
    %264 = vmatpush1.xpose.msra.mxu0 0.0
    %265 = vmatprep.subr.mxu0 0.0
    %266 = vmatpush1.xpose.msra.mxu0 0.0
    %267 = vmatprep.mubr.f32.mxu0 0.0
    %268 = vmatmul.mubr.f32.gmra.mrb[0].mxu0 %v195
    %v269 = vpop.f32.mrb[0].mxu0
    %v270 = vadd.f32 0.0, %v269
    %v271 = vpop.f32.mrb[0].mxu0
    %272 = vmatprep.mubr.f32.mxu0 0.0
    %273 = vmatmul.mubr.f32.gmra.mrb[0].mxu0 %v197
    %v274 = vpop.f32.mrb[0].mxu0
    %v275 = vadd.f32 0.0, %v274
    %v276 = vpop.f32.mrb[0].mxu0
    %277 = vdwg.mxu0
    %278 = vrot.lane.b32.xlu0 %v154, 96
    %v279 = vpop.permute.xlu0 %278
    %280 = vrot.lane.b32.xlu0 %v159, 96
    %v281 = vpop.permute.xlu0 %280
    %v282 = vsel %vm194, %v154, 0
    %v284 = vsel %vm194, %v159, 0
    %v286 = vsel %vm194, %v279, 0
    %v288 = vsel %vm194, %v281, 0
    %290 = vmatprep.subr.mxu0 0.0
    %291 = vmatpush1.xpose.msra.mxu0 %v286
    %292 = vmatprep.subr.mxu0 0.0
    %293 = vmatpush1.xpose.msra.mxu0 %v288
    %294 = vmatprep.subr.mxu0 0.0
    %295 = vmatpush1.xpose.msra.mxu0 0.0
    %296 = vmatprep.subr.mxu0 0.0
    %297 = vmatpush1.xpose.msra.mxu0 0.0
    %298 = vmatprep.subr.mxu0 0.0
    %299 = vmatpush1.xpose.msra.mxu0 0.0
    %300 = vmatprep.subr.mxu0 0.0
    %301 = vmatpush1.xpose.msra.mxu0 0.0
    %302 = vmatprep.subr.mxu0 0.0
    %303 = vmatpush1.xpose.msra.mxu0 0.0
    %304 = vmatprep.subr.mxu0 0.0
    %305 = vmatpush1.xpose.msra.mxu0 0.0
    %306 = vmatprep.subr.mxu0 0.0
    %307 = vmatpush1.xpose.msra.mxu0 0.0
    %308 = vmatprep.subr.mxu0 0.0
    %309 = vmatpush1.xpose.msra.mxu0 0.0
    %310 = vmatprep.subr.mxu0 0.0
    %311 = vmatpush1.xpose.msra.mxu0 0.0
    %312 = vmatprep.subr.mxu0 0.0
    %313 = vmatpush1.xpose.msra.mxu0 0.0
    %314 = vmatprep.subr.mxu0 0.0
    %315 = vmatpush1.xpose.msra.mxu0 0.0
    %316 = vmatprep.subr.mxu0 0.0
    %317 = vmatpush1.xpose.msra.mxu0 0.0
    %318 = vmatprep.subr.mxu0 0.0
    %319 = vmatpush1.xpose.msra.mxu0 0.0
    %320 = vmatprep.subr.mxu0 0.0
    %321 = vmatpush1.xpose.msra.mxu0 0.0
    %322 = vmatprep.subr.mxu0 0.0
    %323 = vmatpush1.xpose.msra.mxu0 0.0
    %324 = vmatprep.subr.mxu0 0.0
    %325 = vmatpush1.xpose.msra.mxu0 0.0
    %326 = vmatprep.subr.mxu0 0.0
    %327 = vmatpush1.xpose.msra.mxu0 0.0
    %328 = vmatprep.subr.mxu0 0.0
    %329 = vmatpush1.xpose.msra.mxu0 0.0
    %330 = vmatprep.subr.mxu0 0.0
    %331 = vmatpush1.xpose.msra.mxu0 0.0
    %332 = vmatprep.subr.mxu0 0.0
    %333 = vmatpush1.xpose.msra.mxu0 0.0
    %334 = vmatprep.subr.mxu0 0.0
    %335 = vmatpush1.xpose.msra.mxu0 0.0
    %336 = vmatprep.subr.mxu0 0.0
    %337 = vmatpush1.xpose.msra.mxu0 0.0
    %338 = vmatprep.subr.mxu0 0.0
    %339 = vmatpush1.xpose.msra.mxu0 0.0
    %340 = vmatprep.subr.mxu0 0.0
    %341 = vmatpush1.xpose.msra.mxu0 0.0
    %342 = vmatprep.subr.mxu0 0.0
    %343 = vmatpush1.xpose.msra.mxu0 0.0
    %344 = vmatprep.subr.mxu0 0.0
    %345 = vmatpush1.xpose.msra.mxu0 0.0
    %346 = vmatprep.subr.mxu0 0.0
    %347 = vmatpush1.xpose.msra.mxu0 0.0
    %348 = vmatprep.subr.mxu0 0.0
    %349 = vmatpush1.xpose.msra.mxu0 0.0
    %350 = vmatprep.subr.mxu0 0.0
    %351 = vmatpush1.xpose.msra.mxu0 0.0
    %352 = vmatprep.subr.mxu0 0.0
    %353 = vmatpush1.xpose.msra.mxu0 0.0
    %354 = vmatprep.mubr.f32.mxu0 0.0
    %355 = vmatmul.mubr.f32.gmra.mrb[0].mxu0 %v282
    %v356 = vpop.f32.mrb[0].mxu0
    %v357 = vadd.f32 0.0, %v356
    %v358 = vpop.f32.mrb[0].mxu0
    %359 = vmatprep.mubr.f32.mxu0 0.0
    %360 = vmatmul.mubr.f32.gmra.mrb[0].mxu0 %v284
    %v361 = vpop.f32.mrb[0].mxu0
    %v362 = vadd.f32 0.0, %v361
    %v363 = vpop.f32.mrb[0].mxu0
    %364 = vdwg.mxu0
    %365 = vrot.lane.b32.xlu0 %v167, 96
    %v366 = vpop.permute.xlu0 %365
    %367 = vrot.lane.b32.xlu0 %v169, 96
    %v368 = vpop.permute.xlu0 %367
    %v369 = vsel %vm194, %v167, 0
    %v371 = vsel %vm194, %v169, 0
    %v373 = vsel %vm194, %v366, 0
    %v375 = vsel %vm194, %v368, 0
    %377 = vmatprep.subr.mxu0 0.0
    %378 = vmatpush1.xpose.msra.mxu0 %v373
    %379 = vmatprep.subr.mxu0 0.0
    %380 = vmatpush1.xpose.msra.mxu0 %v375
    %381 = vmatprep.subr.mxu0 0.0
    %382 = vmatpush1.xpose.msra.mxu0 0.0
    %383 = vmatprep.subr.mxu0 0.0
    %384 = vmatpush1.xpose.msra.mxu0 0.0
    %385 = vmatprep.subr.mxu0 0.0
    %386 = vmatpush1.xpose.msra.mxu0 0.0
    %387 = vmatprep.subr.mxu0 0.0
    %388 = vmatpush1.xpose.msra.mxu0 0.0
    %389 = vmatprep.subr.mxu0 0.0
    %390 = vmatpush1.xpose.msra.mxu0 0.0
    %391 = vmatprep.subr.mxu0 0.0
    %392 = vmatpush1.xpose.msra.mxu0 0.0
    %393 = vmatprep.subr.mxu0 0.0
    %394 = vmatpush1.xpose.msra.mxu0 0.0
    %395 = vmatprep.subr.mxu0 0.0
    %396 = vmatpush1.xpose.msra.mxu0 0.0
    %397 = vmatprep.subr.mxu0 0.0
    %398 = vmatpush1.xpose.msra.mxu0 0.0
    %399 = vmatprep.subr.mxu0 0.0
    %400 = vmatpush1.xpose.msra.mxu0 0.0
    %401 = vmatprep.subr.mxu0 0.0
    %402 = vmatpush1.xpose.msra.mxu0 0.0
    %403 = vmatprep.subr.mxu0 0.0
    %404 = vmatpush1.xpose.msra.mxu0 0.0
    %405 = vmatprep.subr.mxu0 0.0
    %406 = vmatpush1.xpose.msra.mxu0 0.0
    %407 = vmatprep.subr.mxu0 0.0
    %408 = vmatpush1.xpose.msra.mxu0 0.0
    %409 = vmatprep.subr.mxu0 0.0
    %410 = vmatpush1.xpose.msra.mxu0 0.0
    %411 = vmatprep.subr.mxu0 0.0
    %412 = vmatpush1.xpose.msra.mxu0 0.0
    %413 = vmatprep.subr.mxu0 0.0
    %414 = vmatpush1.xpose.msra.mxu0 0.0
    %415 = vmatprep.subr.mxu0 0.0
    %416 = vmatpush1.xpose.msra.mxu0 0.0
    %417 = vmatprep.subr.mxu0 0.0
    %418 = vmatpush1.xpose.msra.mxu0 0.0
    %419 = vmatprep.subr.mxu0 0.0
    %420 = vmatpush1.xpose.msra.mxu0 0.0
    %421 = vmatprep.subr.mxu0 0.0
    %422 = vmatpush1.xpose.msra.mxu0 0.0
    %423 = vmatprep.subr.mxu0 0.0
    %424 = vmatpush1.xpose.msra.mxu0 0.0
    %425 = vmatprep.subr.mxu0 0.0
    %426 = vmatpush1.xpose.msra.mxu0 0.0
    %427 = vmatprep.subr.mxu0 0.0
    %428 = vmatpush1.xpose.msra.mxu0 0.0
    %429 = vmatprep.subr.mxu0 0.0
    %430 = vmatpush1.xpose.msra.mxu0 0.0
    %431 = vmatprep.subr.mxu0 0.0
    %432 = vmatpush1.xpose.msra.mxu0 0.0
    %433 = vmatprep.subr.mxu0 0.0
    %434 = vmatpush1.xpose.msra.mxu0 0.0
    %435 = vmatprep.subr.mxu0 0.0
    %436 = vmatpush1.xpose.msra.mxu0 0.0
    %437 = vmatprep.subr.mxu0 0.0
    %438 = vmatpush1.xpose.msra.mxu0 0.0
    %439 = vmatprep.subr.mxu0 0.0
    %440 = vmatpush1.xpose.msra.mxu0 0.0
    %441 = vmatprep.mubr.f32.mxu0 0.0
    %442 = vmatmul.mubr.f32.gmra.mrb[0].mxu0 %v369
    %v443 = vpop.f32.mrb[0].mxu0
    %v444 = vadd.f32 0.0, %v443
    %v445 = vpop.f32.mrb[0].mxu0
    %446 = vmatprep.mubr.f32.mxu0 0.0
    %447 = vmatmul.mubr.f32.gmra.mrb[0].mxu0 %v371
    %v448 = vpop.f32.mrb[0].mxu0
    %v449 = vadd.f32 0.0, %v448
    %v450 = vpop.f32.mrb[0].mxu0
    %451 = vdwg.mxu0
    %452 = vrot.lane.b32.xlu0 %v171, 96
    %v453 = vpop.permute.xlu0 %452
    %454 = vrot.lane.b32.xlu0 %v173, 96
    %v455 = vpop.permute.xlu0 %454
    %v456 = vsel %vm194, %v171, 0
    %v458 = vsel %vm194, %v173, 0
    %v460 = vsel %vm194, %v453, 0
    %v462 = vsel %vm194, %v455, 0
    %464 = vmatprep.subr.mxu0 0.0
    %465 = vmatpush1.xpose.msra.mxu0 %v460
    %466 = vmatprep.subr.mxu0 0.0
    %467 = vmatpush1.xpose.msra.mxu0 %v462
    %468 = vmatprep.subr.mxu0 0.0
    %469 = vmatpush1.xpose.msra.mxu0 0.0
    %470 = vmatprep.subr.mxu0 0.0
    %471 = vmatpush1.xpose.msra.mxu0 0.0
    %472 = vmatprep.subr.mxu0 0.0
    %473 = vmatpush1.xpose.msra.mxu0 0.0
    %474 = vmatprep.subr.mxu0 0.0
    %475 = vmatpush1.xpose.msra.mxu0 0.0
    %476 = vmatprep.subr.mxu0 0.0
    %477 = vmatpush1.xpose.msra.mxu0 0.0
    %478 = vmatprep.subr.mxu0 0.0
    %479 = vmatpush1.xpose.msra.mxu0 0.0
    %480 = vmatprep.subr.mxu0 0.0
    %481 = vmatpush1.xpose.msra.mxu0 0.0
    %482 = vmatprep.subr.mxu0 0.0
    %483 = vmatpush1.xpose.msra.mxu0 0.0
    %484 = vmatprep.subr.mxu0 0.0
    %485 = vmatpush1.xpose.msra.mxu0 0.0
    %486 = vmatprep.subr.mxu0 0.0
    %487 = vmatpush1.xpose.msra.mxu0 0.0
    %488 = vmatprep.subr.mxu0 0.0
    %489 = vmatpush1.xpose.msra.mxu0 0.0
    %490 = vmatprep.subr.mxu0 0.0
    %491 = vmatpush1.xpose.msra.mxu0 0.0
    %492 = vmatprep.subr.mxu0 0.0
    %493 = vmatpush1.xpose.msra.mxu0 0.0
    %494 = vmatprep.subr.mxu0 0.0
    %495 = vmatpush1.xpose.msra.mxu0 0.0
    %496 = vmatprep.subr.mxu0 0.0
    %497 = vmatpush1.xpose.msra.mxu0 0.0
    %498 = vmatprep.subr.mxu0 0.0
    %499 = vmatpush1.xpose.msra.mxu0 0.0
    %500 = vmatprep.subr.mxu0 0.0
    %501 = vmatpush1.xpose.msra.mxu0 0.0
    %502 = vmatprep.subr.mxu0 0.0
    %503 = vmatpush1.xpose.msra.mxu0 0.0
    %504 = vmatprep.subr.mxu0 0.0
    %505 = vmatpush1.xpose.msra.mxu0 0.0
    %506 = vmatprep.subr.mxu0 0.0
    %507 = vmatpush1.xpose.msra.mxu0 0.0
    %508 = vmatprep.subr.mxu0 0.0
    %509 = vmatpush1.xpose.msra.mxu0 0.0
    %510 = vmatprep.subr.mxu0 0.0
    %511 = vmatpush1.xpose.msra.mxu0 0.0
    %512 = vmatprep.subr.mxu0 0.0
    %513 = vmatpush1.xpose.msra.mxu0 0.0
    %514 = vmatprep.subr.mxu0 0.0
    %515 = vmatpush1.xpose.msra.mxu0 0.0
    %516 = vmatprep.subr.mxu0 0.0
    %517 = vmatpush1.xpose.msra.mxu0 0.0
    %518 = vmatprep.subr.mxu0 0.0
    %519 = vmatpush1.xpose.msra.mxu0 0.0
    %520 = vmatprep.subr.mxu0 0.0
    %521 = vmatpush1.xpose.msra.mxu0 0.0
    %522 = vmatprep.subr.mxu0 0.0
    %523 = vmatpush1.xpose.msra.mxu0 0.0
    %524 = vmatprep.subr.mxu0 0.0
    %525 = vmatpush1.xpose.msra.mxu0 0.0
    %526 = vmatprep.subr.mxu0 0.0
    %527 = vmatpush1.xpose.msra.mxu0 0.0
    %528 = vmatprep.mubr.f32.mxu0 0.0
    %529 = vmatmul.mubr.f32.gmra.mrb[0].mxu0 %v456
    %v530 = vpop.f32.mrb[0].mxu0
    %v531 = vadd.f32 0.0, %v530
    %v532 = vpop.f32.mrb[0].mxu0
    %533 = vmatprep.mubr.f32.mxu0 0.0
    %534 = vmatmul.mubr.f32.gmra.mrb[0].mxu0 %v458
    %v535 = vpop.f32.mrb[0].mxu0
    %v536 = vadd.f32 0.0, %v535
    %v537 = vpop.f32.mrb[0].mxu0
    %538 = vdwg.mxu0
    %539 = vrot.lane.b32.xlu0 %v175, 96
    %v540 = vpop.permute.xlu0 %539
    %541 = vrot.lane.b32.xlu0 %v177, 96
    %v542 = vpop.permute.xlu0 %541
    %v543 = vsel %vm194, %v175, 0
    %v545 = vsel %vm194, %v177, 0
    %v547 = vsel %vm194, %v540, 0
    %v549 = vsel %vm194, %v542, 0
    %551 = vmatprep.subr.mxu0 0.0
    %552 = vmatpush1.xpose.msra.mxu0 %v547
    %553 = vmatprep.subr.mxu0 0.0
    %554 = vmatpush1.xpose.msra.mxu0 %v549
    %555 = vmatprep.subr.mxu0 0.0
    %556 = vmatpush1.xpose.msra.mxu0 0.0
    %557 = vmatprep.subr.mxu0 0.0
    %558 = vmatpush1.xpose.msra.mxu0 0.0
    %559 = vmatprep.subr.mxu0 0.0
    %560 = vmatpush1.xpose.msra.mxu0 0.0
    %561 = vmatprep.subr.mxu0 0.0
    %562 = vmatpush1.xpose.msra.mxu0 0.0
    %563 = vmatprep.subr.mxu0 0.0
    %564 = vmatpush1.xpose.msra.mxu0 0.0
    %565 = vmatprep.subr.mxu0 0.0
    %566 = vmatpush1.xpose.msra.mxu0 0.0
    %567 = vmatprep.subr.mxu0 0.0
    %568 = vmatpush1.xpose.msra.mxu0 0.0
    %569 = vmatprep.subr.mxu0 0.0
    %570 = vmatpush1.xpose.msra.mxu0 0.0
    %571 = vmatprep.subr.mxu0 0.0
    %572 = vmatpush1.xpose.msra.mxu0 0.0
    %573 = vmatprep.subr.mxu0 0.0
    %574 = vmatpush1.xpose.msra.mxu0 0.0
    %575 = vmatprep.subr.mxu0 0.0
    %576 = vmatpush1.xpose.msra.mxu0 0.0
    %577 = vmatprep.subr.mxu0 0.0
    %578 = vmatpush1.xpose.msra.mxu0 0.0
    %579 = vmatprep.subr.mxu0 0.0
    %580 = vmatpush1.xpose.msra.mxu0 0.0
    %581 = vmatprep.subr.mxu0 0.0
    %582 = vmatpush1.xpose.msra.mxu0 0.0
    %583 = vmatprep.subr.mxu0 0.0
    %584 = vmatpush1.xpose.msra.mxu0 0.0
    %585 = vmatprep.subr.mxu0 0.0
    %586 = vmatpush1.xpose.msra.mxu0 0.0
    %587 = vmatprep.subr.mxu0 0.0
    %588 = vmatpush1.xpose.msra.mxu0 0.0
    %589 = vmatprep.subr.mxu0 0.0
    %590 = vmatpush1.xpose.msra.mxu0 0.0
    %591 = vmatprep.subr.mxu0 0.0
    %592 = vmatpush1.xpose.msra.mxu0 0.0
    %593 = vmatprep.subr.mxu0 0.0
    %594 = vmatpush1.xpose.msra.mxu0 0.0
    %595 = vmatprep.subr.mxu0 0.0
    %596 = vmatpush1.xpose.msra.mxu0 0.0
    %597 = vmatprep.subr.mxu0 0.0
    %598 = vmatpush1.xpose.msra.mxu0 0.0
    %599 = vmatprep.subr.mxu0 0.0
    %600 = vmatpush1.xpose.msra.mxu0 0.0
    %601 = vmatprep.subr.mxu0 0.0
    %602 = vmatpush1.xpose.msra.mxu0 0.0
    %603 = vmatprep.subr.mxu0 0.0
    %604 = vmatpush1.xpose.msra.mxu0 0.0
    %605 = vmatprep.subr.mxu0 0.0
    %606 = vmatpush1.xpose.msra.mxu0 0.0
    %607 = vmatprep.subr.mxu0 0.0
    %608 = vmatpush1.xpose.msra.mxu0 0.0
    %609 = vmatprep.subr.mxu0 0.0
    %610 = vmatpush1.xpose.msra.mxu0 0.0
    %611 = vmatprep.subr.mxu0 0.0
    %612 = vmatpush1.xpose.msra.mxu0 0.0
    %613 = vmatprep.subr.mxu0 0.0
    %614 = vmatpush1.xpose.msra.mxu0 0.0
    %615 = vmatprep.mubr.f32.mxu0 0.0
    %616 = vmatmul.mubr.f32.gmra.mrb[0].mxu0 %v543
    %v617 = vpop.f32.mrb[0].mxu0
    %v618 = vadd.f32 0.0, %v617
    %v619 = vpop.f32.mrb[0].mxu0
    %620 = vmatprep.mubr.f32.mxu0 0.0
    %621 = vmatmul.mubr.f32.gmra.mrb[0].mxu0 %v545
    %v622 = vpop.f32.mrb[0].mxu0
    %v623 = vadd.f32 0.0, %v622
    %v624 = vpop.f32.mrb[0].mxu0
    %625 = vdwg.mxu0
    %626 = vrot.lane.b32.xlu0 %v179, 96
    %v627 = vpop.permute.xlu0 %626
    %628 = vrot.lane.b32.xlu0 %v181, 96
    %v629 = vpop.permute.xlu0 %628
    %v630 = vsel %vm194, %v179, 0
    %v632 = vsel %vm194, %v181, 0
    %v634 = vsel %vm194, %v627, 0
    %v636 = vsel %vm194, %v629, 0
    %638 = vmatprep.subr.mxu0 0.0
    %639 = vmatpush1.xpose.msra.mxu0 %v634
    %640 = vmatprep.subr.mxu0 0.0
    %641 = vmatpush1.xpose.msra.mxu0 %v636
    %642 = vmatprep.subr.mxu0 0.0
    %643 = vmatpush1.xpose.msra.mxu0 0.0
    %644 = vmatprep.subr.mxu0 0.0
    %645 = vmatpush1.xpose.msra.mxu0 0.0
    %646 = vmatprep.subr.mxu0 0.0
    %647 = vmatpush1.xpose.msra.mxu0 0.0
    %648 = vmatprep.subr.mxu0 0.0
    %649 = vmatpush1.xpose.msra.mxu0 0.0
    %650 = vmatprep.subr.mxu0 0.0
    %651 = vmatpush1.xpose.msra.mxu0 0.0
    %652 = vmatprep.subr.mxu0 0.0
    %653 = vmatpush1.xpose.msra.mxu0 0.0
    %654 = vmatprep.subr.mxu0 0.0
    %655 = vmatpush1.xpose.msra.mxu0 0.0
    %656 = vmatprep.subr.mxu0 0.0
    %657 = vmatpush1.xpose.msra.mxu0 0.0
    %658 = vmatprep.subr.mxu0 0.0
    %659 = vmatpush1.xpose.msra.mxu0 0.0
    %660 = vmatprep.subr.mxu0 0.0
    %661 = vmatpush1.xpose.msra.mxu0 0.0
    %662 = vmatprep.subr.mxu0 0.0
    %663 = vmatpush1.xpose.msra.mxu0 0.0
    %664 = vmatprep.subr.mxu0 0.0
    %665 = vmatpush1.xpose.msra.mxu0 0.0
    %666 = vmatprep.subr.mxu0 0.0
    %667 = vmatpush1.xpose.msra.mxu0 0.0
    %668 = vmatprep.subr.mxu0 0.0
    %669 = vmatpush1.xpose.msra.mxu0 0.0
    %670 = vmatprep.subr.mxu0 0.0
    %671 = vmatpush1.xpose.msra.mxu0 0.0
    %672 = vmatprep.subr.mxu0 0.0
    %673 = vmatpush1.xpose.msra.mxu0 0.0
    %674 = vmatprep.subr.mxu0 0.0
    %675 = vmatpush1.xpose.msra.mxu0 0.0
    %676 = vmatprep.subr.mxu0 0.0
    %677 = vmatpush1.xpose.msra.mxu0 0.0
    %678 = vmatprep.subr.mxu0 0.0
    %679 = vmatpush1.xpose.msra.mxu0 0.0
    %680 = vmatprep.subr.mxu0 0.0
    %681 = vmatpush1.xpose.msra.mxu0 0.0
    %682 = vmatprep.subr.mxu0 0.0
    %683 = vmatpush1.xpose.msra.mxu0 0.0
    %684 = vmatprep.subr.mxu0 0.0
    %685 = vmatpush1.xpose.msra.mxu0 0.0
    %686 = vmatprep.subr.mxu0 0.0
    %687 = vmatpush1.xpose.msra.mxu0 0.0
    %688 = vmatprep.subr.mxu0 0.0
    %689 = vmatpush1.xpose.msra.mxu0 0.0
    %690 = vmatprep.subr.mxu0 0.0
    %691 = vmatpush1.xpose.msra.mxu0 0.0
    %692 = vmatprep.subr.mxu0 0.0
    %693 = vmatpush1.xpose.msra.mxu0 0.0
    %694 = vmatprep.subr.mxu0 0.0
    %695 = vmatpush1.xpose.msra.mxu0 0.0
    %696 = vmatprep.subr.mxu0 0.0
    %697 = vmatpush1.xpose.msra.mxu0 0.0
    %698 = vmatprep.subr.mxu0 0.0
    %699 = vmatpush1.xpose.msra.mxu0 0.0
    %700 = vmatprep.subr.mxu0 0.0
    %701 = vmatpush1.xpose.msra.mxu0 0.0
    %702 = vmatprep.mubr.f32.mxu0 0.0
    %703 = vmatmul.mubr.f32.gmra.mrb[0].mxu0 %v630
    %v704 = vpop.f32.mrb[0].mxu0
    %v705 = vadd.f32 0.0, %v704
    %v706 = vpop.f32.mrb[0].mxu0
    %707 = vmatprep.mubr.f32.mxu0 0.0
    %708 = vmatmul.mubr.f32.gmra.mrb[0].mxu0 %v632
    %v709 = vpop.f32.mrb[0].mxu0
    %v710 = vadd.f32 0.0, %v709
    %v711 = vpop.f32.mrb[0].mxu0
    %712 = vdwg.mxu0
    %713 = vrot.lane.b32.xlu0 %v183, 96
    %v714 = vpop.permute.xlu0 %713
    %715 = vrot.lane.b32.xlu0 %v185, 96
    %v716 = vpop.permute.xlu0 %715
    %v717 = vsel %vm194, %v183, 0
    %v719 = vsel %vm194, %v185, 0
    %v721 = vsel %vm194, %v714, 0
    %v723 = vsel %vm194, %v716, 0
    %725 = vmatprep.subr.mxu0 0.0
    %726 = vmatpush1.xpose.msra.mxu0 %v721
    %727 = vmatprep.subr.mxu0 0.0
    %728 = vmatpush1.xpose.msra.mxu0 %v723
    %729 = vmatprep.subr.mxu0 0.0
    %730 = vmatpush1.xpose.msra.mxu0 0.0
    %731 = vmatprep.subr.mxu0 0.0
    %732 = vmatpush1.xpose.msra.mxu0 0.0
    %733 = vmatprep.subr.mxu0 0.0
    %734 = vmatpush1.xpose.msra.mxu0 0.0
    %735 = vmatprep.subr.mxu0 0.0
    %736 = vmatpush1.xpose.msra.mxu0 0.0
    %737 = vmatprep.subr.mxu0 0.0
    %738 = vmatpush1.xpose.msra.mxu0 0.0
    %739 = vmatprep.subr.mxu0 0.0
    %740 = vmatpush1.xpose.msra.mxu0 0.0
    %741 = vmatprep.subr.mxu0 0.0
    %742 = vmatpush1.xpose.msra.mxu0 0.0
    %743 = vmatprep.subr.mxu0 0.0
    %744 = vmatpush1.xpose.msra.mxu0 0.0
    %745 = vmatprep.subr.mxu0 0.0
    %746 = vmatpush1.xpose.msra.mxu0 0.0
    %747 = vmatprep.subr.mxu0 0.0
    %748 = vmatpush1.xpose.msra.mxu0 0.0
    %749 = vmatprep.subr.mxu0 0.0
    %750 = vmatpush1.xpose.msra.mxu0 0.0
    %751 = vmatprep.subr.mxu0 0.0
    %752 = vmatpush1.xpose.msra.mxu0 0.0
    %753 = vmatprep.subr.mxu0 0.0
    %754 = vmatpush1.xpose.msra.mxu0 0.0
    %755 = vmatprep.subr.mxu0 0.0
    %756 = vmatpush1.xpose.msra.mxu0 0.0
    %757 = vmatprep.subr.mxu0 0.0
    %758 = vmatpush1.xpose.msra.mxu0 0.0
    %759 = vmatprep.subr.mxu0 0.0
    %760 = vmatpush1.xpose.msra.mxu0 0.0
    %761 = vmatprep.subr.mxu0 0.0
    %762 = vmatpush1.xpose.msra.mxu0 0.0
    %763 = vmatprep.subr.mxu0 0.0
    %764 = vmatpush1.xpose.msra.mxu0 0.0
    %765 = vmatprep.subr.mxu0 0.0
    %766 = vmatpush1.xpose.msra.mxu0 0.0
    %767 = vmatprep.subr.mxu0 0.0
    %768 = vmatpush1.xpose.msra.mxu0 0.0
    %769 = vmatprep.subr.mxu0 0.0
    %770 = vmatpush1.xpose.msra.mxu0 0.0
    %771 = vmatprep.subr.mxu0 0.0
    %772 = vmatpush1.xpose.msra.mxu0 0.0
    %773 = vmatprep.subr.mxu0 0.0
    %774 = vmatpush1.xpose.msra.mxu0 0.0
    %775 = vmatprep.subr.mxu0 0.0
    %776 = vmatpush1.xpose.msra.mxu0 0.0
    %777 = vmatprep.subr.mxu0 0.0
    %778 = vmatpush1.xpose.msra.mxu0 0.0
    %779 = vmatprep.subr.mxu0 0.0
    %780 = vmatpush1.xpose.msra.mxu0 0.0
    %781 = vmatprep.subr.mxu0 0.0
    %782 = vmatpush1.xpose.msra.mxu0 0.0
    %783 = vmatprep.subr.mxu0 0.0
    %784 = vmatpush1.xpose.msra.mxu0 0.0
    %785 = vmatprep.subr.mxu0 0.0
    %786 = vmatpush1.xpose.msra.mxu0 0.0
    %787 = vmatprep.subr.mxu0 0.0
    %788 = vmatpush1.xpose.msra.mxu0 0.0
    %789 = vmatprep.mubr.f32.mxu0 0.0
    %790 = vmatmul.mubr.f32.gmra.mrb[0].mxu0 %v717
    %v791 = vpop.f32.mrb[0].mxu0
    %v792 = vadd.f32 0.0, %v791
    %v793 = vpop.f32.mrb[0].mxu0
    %794 = vmatprep.mubr.f32.mxu0 0.0
    %795 = vmatmul.mubr.f32.gmra.mrb[0].mxu0 %v719
    %v796 = vpop.f32.mrb[0].mxu0
    %v797 = vadd.f32 0.0, %v796
    %v798 = vpop.f32.mrb[0].mxu0
    %799 = vdwg.mxu0
    %800 = vrot.lane.b32.xlu0 %v187, 96
    %v801 = vpop.permute.xlu0 %800
    %802 = vrot.lane.b32.xlu0 %v189, 96
    %v803 = vpop.permute.xlu0 %802
    %v804 = vsel %vm194, %v187, 0
    %v806 = vsel %vm194, %v189, 0
    %v808 = vsel %vm194, %v801, 0
    %v810 = vsel %vm194, %v803, 0
    %812 = vmatprep.subr.mxu0 0.0
    %813 = vmatpush1.xpose.msra.mxu0 %v808
    %814 = vmatprep.subr.mxu0 0.0
    %815 = vmatpush1.xpose.msra.mxu0 %v810
    %816 = vmatprep.subr.mxu0 0.0
    %817 = vmatpush1.xpose.msra.mxu0 0.0
    %818 = vmatprep.subr.mxu0 0.0
    %819 = vmatpush1.xpose.msra.mxu0 0.0
    %820 = vmatprep.subr.mxu0 0.0
    %821 = vmatpush1.xpose.msra.mxu0 0.0
    %822 = vmatprep.subr.mxu0 0.0
    %823 = vmatpush1.xpose.msra.mxu0 0.0
    %824 = vmatprep.subr.mxu0 0.0
    %825 = vmatpush1.xpose.msra.mxu0 0.0
    %826 = vmatprep.subr.mxu0 0.0
    %827 = vmatpush1.xpose.msra.mxu0 0.0
    %828 = vmatprep.subr.mxu0 0.0
    %829 = vmatpush1.xpose.msra.mxu0 0.0
    %830 = vmatprep.subr.mxu0 0.0
    %831 = vmatpush1.xpose.msra.mxu0 0.0
    %832 = vmatprep.subr.mxu0 0.0
    %833 = vmatpush1.xpose.msra.mxu0 0.0
    %834 = vmatprep.subr.mxu0 0.0
    %835 = vmatpush1.xpose.msra.mxu0 0.0
    %836 = vmatprep.subr.mxu0 0.0
    %837 = vmatpush1.xpose.msra.mxu0 0.0
    %838 = vmatprep.subr.mxu0 0.0
    %839 = vmatpush1.xpose.msra.mxu0 0.0
    %840 = vmatprep.subr.mxu0 0.0
    %841 = vmatpush1.xpose.msra.mxu0 0.0
    %842 = vmatprep.subr.mxu0 0.0
    %843 = vmatpush1.xpose.msra.mxu0 0.0
    %844 = vmatprep.subr.mxu0 0.0
    %845 = vmatpush1.xpose.msra.mxu0 0.0
    %846 = vmatprep.subr.mxu0 0.0
    %847 = vmatpush1.xpose.msra.mxu0 0.0
    %848 = vmatprep.subr.mxu0 0.0
    %849 = vmatpush1.xpose.msra.mxu0 0.0
    %850 = vmatprep.subr.mxu0 0.0
    %851 = vmatpush1.xpose.msra.mxu0 0.0
    %852 = vmatprep.subr.mxu0 0.0
    %853 = vmatpush1.xpose.msra.mxu0 0.0
    %854 = vmatprep.subr.mxu0 0.0
    %855 = vmatpush1.xpose.msra.mxu0 0.0
    %856 = vmatprep.subr.mxu0 0.0
    %857 = vmatpush1.xpose.msra.mxu0 0.0
    %858 = vmatprep.subr.mxu0 0.0
    %859 = vmatpush1.xpose.msra.mxu0 0.0
    %860 = vmatprep.subr.mxu0 0.0
    %861 = vmatpush1.xpose.msra.mxu0 0.0
    %862 = vmatprep.subr.mxu0 0.0
    %863 = vmatpush1.xpose.msra.mxu0 0.0
    %864 = vmatprep.subr.mxu0 0.0
    %865 = vmatpush1.xpose.msra.mxu0 0.0
    %866 = vmatprep.subr.mxu0 0.0
    %867 = vmatpush1.xpose.msra.mxu0 0.0
    %868 = vmatprep.subr.mxu0 0.0
    %869 = vmatpush1.xpose.msra.mxu0 0.0
    %870 = vmatprep.subr.mxu0 0.0
    %871 = vmatpush1.xpose.msra.mxu0 0.0
    %872 = vmatprep.subr.mxu0 0.0
    %873 = vmatpush1.xpose.msra.mxu0 0.0
    %874 = vmatprep.subr.mxu0 0.0
    %875 = vmatpush1.xpose.msra.mxu0 0.0
    %876 = vmatprep.mubr.f32.mxu0 0.0
    %877 = vmatmul.mubr.f32.gmra.mrb[0].mxu0 %v804
    %v878 = vpop.f32.mrb[0].mxu0
    %v879 = vadd.f32 0.0, %v878
    %v880 = vpop.f32.mrb[0].mxu0
    %881 = vmatprep.mubr.f32.mxu0 0.0
    %882 = vmatmul.mubr.f32.gmra.mrb[0].mxu0 %v806
    %v883 = vpop.f32.mrb[0].mxu0
    %v884 = vadd.f32 0.0, %v883
    %v885 = vpop.f32.mrb[0].mxu0
    %886 = vdwg.mxu0
    %vm887 = vcmask 130048
    %v888 = vsel %vm887, %v270, -inf
    %889 = vmax.xlane.f32.xlu0 %v888
    %v890 = vpop.xlane.xlu0 %889
    %v891 = vsel %vm887, %v275, -inf
    %892 = vmax.xlane.f32.xlu0 %v891
    %v893 = vpop.xlane.xlu0 %892
    %v894 = vsel %vm887, %v357, -inf
    %895 = vmax.xlane.f32.xlu0 %v894
    %v896 = vpop.xlane.xlu0 %895
    %v897 = vsel %vm887, %v362, -inf
    %898 = vmax.xlane.f32.xlu0 %v897
    %v899 = vpop.xlane.xlu0 %898
    %v900 = vsel %vm887, %v444, -inf
    %901 = vmax.xlane.f32.xlu0 %v900
    %v902 = vpop.xlane.xlu0 %901
    %v903 = vsel %vm887, %v449, -inf
    %904 = vmax.xlane.f32.xlu0 %v903
    %v905 = vpop.xlane.xlu0 %904
    %v906 = vsel %vm887, %v531, -inf
    %907 = vmax.xlane.f32.xlu0 %v906
    %v908 = vpop.xlane.xlu0 %907
    %v909 = vsel %vm887, %v536, -inf
    %910 = vmax.xlane.f32.xlu0 %v909
    %v911 = vpop.xlane.xlu0 %910
    %v912 = vsel %vm887, %v618, -inf
    %913 = vmax.xlane.f32.xlu0 %v912
    %v914 = vpop.xlane.xlu0 %913
    %v915 = vsel %vm887, %v623, -inf
    %916 = vmax.xlane.f32.xlu0 %v915
    %v917 = vpop.xlane.xlu0 %916
    %v918 = vsel %vm887, %v705, -inf
    %919 = vmax.xlane.f32.xlu0 %v918
    %v920 = vpop.xlane.xlu0 %919
    %v921 = vsel %vm887, %v710, -inf
    %922 = vmax.xlane.f32.xlu0 %v921
    %v923 = vpop.xlane.xlu0 %922
    %v924 = vsel %vm887, %v792, -inf
    %925 = vmax.xlane.f32.xlu0 %v924
    %v926 = vpop.xlane.xlu0 %925
    %v927 = vsel %vm887, %v797, -inf
    %928 = vmax.xlane.f32.xlu0 %v927
    %v929 = vpop.xlane.xlu0 %928
    %v930 = vsel %vm887, %v879, -inf
    %931 = vmax.xlane.f32.xlu0 %v930
    %v932 = vpop.xlane.xlu0 %931
    %v933 = vsel %vm887, %v884, -inf
    %934 = vmax.xlane.f32.xlu0 %v933
    %v935 = vpop.xlane.xlu0 %934
    %v936 = vsub.f32 %v270, %v890
    %v937 = vsub.f32 %v275, %v893
    %v938 = vsub.f32 %v357, %v896
    %v939 = vsub.f32 %v362, %v899
    %v940 = vsub.f32 %v444, %v902
    %v941 = vsub.f32 %v449, %v905
    %v942 = vsub.f32 %v531, %v908
    %v943 = vsub.f32 %v536, %v911
    %v944 = vsub.f32 %v618, %v914
    %v945 = vsub.f32 %v623, %v917
    %v946 = vsub.f32 %v705, %v920
    %v947 = vsub.f32 %v710, %v923
    %v948 = vsub.f32 %v792, %v926
    %v949 = vsub.f32 %v797, %v929
    %v950 = vsub.f32 %v879, %v932
    %v951 = vsub.f32 %v884, %v935
    %v952 = vmul.f32 %v936, 1.442695
    %v953 = vpow.pop %v952
    %v954 = vmul.f32 %v937, 1.442695
    %v955 = vpow.pop %v954
    %v956 = vmul.f32 %v938, 1.442695
    %v957 = vpow.pop %v956
    %v958 = vmul.f32 %v939, 1.442695
    %v959 = vpow.pop %v958
    %v960 = vmul.f32 %v940, 1.442695
    %v961 = vpow.pop %v960
    %v962 = vmul.f32 %v941, 1.442695
    %v963 = vpow.pop %v962
    %v964 = vmul.f32 %v942, 1.442695
    %v965 = vpow.pop %v964
    %v966 = vmul.f32 %v943, 1.442695
    %v967 = vpow.pop %v966
    %v968 = vmul.f32 %v944, 1.442695
    %v969 = vpow.pop %v968
    %v970 = vmul.f32 %v945, 1.442695
    %v971 = vpow.pop %v970
    %v972 = vmul.f32 %v946, 1.442695
    %v973 = vpow.pop %v972
    %v974 = vmul.f32 %v947, 1.442695
    %v975 = vpow.pop %v974
    %v976 = vmul.f32 %v948, 1.442695
    %v977 = vpow.pop %v976
    %v978 = vmul.f32 %v949, 1.442695
    %v979 = vpow.pop %v978
    %v980 = vmul.f32 %v950, 1.442695
    %v981 = vpow.pop %v980
    %v982 = vmul.f32 %v951, 1.442695
    %v983 = vpow.pop %v982
    %v984 = vsel %vm887, %v953, 0.0
    %985 = vadd.xlane.f32.xlu0 %v984
    %v986 = vpop.xlane.xlu0 %985
    %v987 = vsel %vm887, %v955, 0.0
    %988 = vadd.xlane.f32.xlu0 %v987
    %v989 = vpop.xlane.xlu0 %988
    %v990 = vsel %vm887, %v957, 0.0
    %991 = vadd.xlane.f32.xlu0 %v990
    %v992 = vpop.xlane.xlu0 %991
    %v993 = vsel %vm887, %v959, 0.0
    %994 = vadd.xlane.f32.xlu0 %v993
    %v995 = vpop.xlane.xlu0 %994
    %v996 = vsel %vm887, %v961, 0.0
    %997 = vadd.xlane.f32.xlu0 %v996
    %v998 = vpop.xlane.xlu0 %997
    %v999 = vsel %vm887, %v963, 0.0
    %1000 = vadd.xlane.f32.xlu0 %v999
    %v1001 = vpop.xlane.xlu0 %1000
    %v1002 = vsel %vm887, %v965, 0.0
    %1003 = vadd.xlane.f32.xlu0 %v1002
    %v1004 = vpop.xlane.xlu0 %1003
    %v1005 = vsel %vm887, %v967, 0.0
    %1006 = vadd.xlane.f32.xlu0 %v1005
    %v1007 = vpop.xlane.xlu0 %1006
    %v1008 = vsel %vm887, %v969, 0.0
    %1009 = vadd.xlane.f32.xlu0 %v1008
    %v1010 = vpop.xlane.xlu0 %1009
    %v1011 = vsel %vm887, %v971, 0.0
    %1012 = vadd.xlane.f32.xlu0 %v1011
    %v1013 = vpop.xlane.xlu0 %1012
    %v1014 = vsel %vm887, %v973, 0.0
    %1015 = vadd.xlane.f32.xlu0 %v1014
    %v1016 = vpop.xlane.xlu0 %1015
    %v1017 = vsel %vm887, %v975, 0.0
    %1018 = vadd.xlane.f32.xlu0 %v1017
    %v1019 = vpop.xlane.xlu0 %1018
    %v1020 = vsel %vm887, %v977, 0.0
    %1021 = vadd.xlane.f32.xlu0 %v1020
    %v1022 = vpop.xlane.xlu0 %1021
    %v1023 = vsel %vm887, %v979, 0.0
    %1024 = vadd.xlane.f32.xlu0 %v1023
    %v1025 = vpop.xlane.xlu0 %1024
    %v1026 = vsel %vm887, %v981, 0.0
    %1027 = vadd.xlane.f32.xlu0 %v1026
    %v1028 = vpop.xlane.xlu0 %1027
    %v1029 = vsel %vm887, %v983, 0.0
    %1030 = vadd.xlane.f32.xlu0 %v1029
    %v1031 = vpop.xlane.xlu0 %1030
    %v1032 = vrcp.pop %v986
    %v1033 = vrcp.pop %v989
    %v1034 = vrcp.pop %v992
    %v1035 = vrcp.pop %v995
    %v1036 = vrcp.pop %v998
    %v1037 = vrcp.pop %v1001
    %v1038 = vrcp.pop %v1004
    %v1039 = vrcp.pop %v1007
    %v1040 = vrcp.pop %v1010
    %v1041 = vrcp.pop %v1013
    %v1042 = vrcp.pop %v1016
    %v1043 = vrcp.pop %v1019
    %v1044 = vrcp.pop %v1022
    %v1045 = vrcp.pop %v1025
    %v1046 = vrcp.pop %v1028
    %v1047 = vrcp.pop %v1031
    %v1048 = vmul.f32 %v953, %v1032
    %v1049 = vmul.f32 %v955, %v1033
    %v1050 = vmul.f32 %v957, %v1034
    %v1051 = vmul.f32 %v959, %v1035
    %v1052 = vmul.f32 %v961, %v1036
    %v1053 = vmul.f32 %v963, %v1037
    %v1054 = vmul.f32 %v965, %v1038
    %v1055 = vmul.f32 %v967, %v1039
    %v1056 = vmul.f32 %v969, %v1040
    %v1057 = vmul.f32 %v971, %v1041
    %v1058 = vmul.f32 %v973, %v1042
    %v1059 = vmul.f32 %v975, %v1043
    %v1060 = vmul.f32 %v977, %v1044
    %v1061 = vmul.f32 %v979, %v1045
    %v1062 = vmul.f32 %v981, %v1046
    %v1063 = vmul.f32 %v983, %v1047
    %1064 = vrot.lane.b32.xlu0 %v144, 64
    %v1065 = vpop.permute.xlu0 %1064
    %1066 = vrot.lane.b32.xlu0 %v149, 64
    %v1067 = vpop.permute.xlu0 %1066
    %v1071 = vsel %vm887, %v1048, 0
    %v1074 = vsel %vm887, %v1049, 0
    %1076 = vmatprep.subr.mxu0 0.0
    %1077 = vmatpush1.msra.mxu0 %v1065
    %1078 = vmatprep.subr.mxu0 0.0
    %1079 = vmatpush1.msra.mxu0 %v1067
    %1080 = vmatprep.subr.mxu0 0.0
    %1081 = vmatpush1.msra.mxu0 0.0
    %1082 = vmatprep.subr.mxu0 0.0
    %1083 = vmatpush1.msra.mxu0 0.0
    %1084 = vmatprep.subr.mxu0 0.0
    %1085 = vmatpush1.msra.mxu0 0.0
    %1086 = vmatprep.subr.mxu0 0.0
    %1087 = vmatpush1.msra.mxu0 0.0
    %1088 = vmatprep.subr.mxu0 0.0
    %1089 = vmatpush1.msra.mxu0 0.0
    %1090 = vmatprep.subr.mxu0 0.0
    %1091 = vmatpush1.msra.mxu0 0.0
    %1092 = vmatprep.subr.mxu0 0.0
    %1093 = vmatpush1.msra.mxu0 0.0
    %1094 = vmatprep.subr.mxu0 0.0
    %1095 = vmatpush1.msra.mxu0 0.0
    %1096 = vmatprep.subr.mxu0 0.0
    %1097 = vmatpush1.msra.mxu0 0.0
    %1098 = vmatprep.subr.mxu0 0.0
    %1099 = vmatpush1.msra.mxu0 0.0
    %1100 = vmatprep.subr.mxu0 0.0
    %1101 = vmatpush1.msra.mxu0 0.0
    %1102 = vmatprep.subr.mxu0 0.0
    %1103 = vmatpush1.msra.mxu0 0.0
    %1104 = vmatprep.subr.mxu0 0.0
    %1105 = vmatpush1.msra.mxu0 0.0
    %1106 = vmatprep.subr.mxu0 0.0
    %1107 = vmatpush1.msra.mxu0 0.0
    %1108 = vmatprep.subr.mxu0 0.0
    %1109 = vmatpush1.msra.mxu0 0.0
    %1110 = vmatprep.subr.mxu0 0.0
    %1111 = vmatpush1.msra.mxu0 0.0
    %1112 = vmatprep.subr.mxu0 0.0
    %1113 = vmatpush1.msra.mxu0 0.0
    %1114 = vmatprep.subr.mxu0 0.0
    %1115 = vmatpush1.msra.mxu0 0.0
    %1116 = vmatprep.subr.mxu0 0.0
    %1117 = vmatpush1.msra.mxu0 0.0
    %1118 = vmatprep.subr.mxu0 0.0
    %1119 = vmatpush1.msra.mxu0 0.0
    %1120 = vmatprep.subr.mxu0 0.0
    %1121 = vmatpush1.msra.mxu0 0.0
    %1122 = vmatprep.subr.mxu0 0.0
    %1123 = vmatpush1.msra.mxu0 0.0
    %1124 = vmatprep.subr.mxu0 0.0
    %1125 = vmatpush1.msra.mxu0 0.0
    %1126 = vmatprep.subr.mxu0 0.0
    %1127 = vmatpush1.msra.mxu0 0.0
    %1128 = vmatprep.subr.mxu0 0.0
    %1129 = vmatpush1.msra.mxu0 0.0
    %1130 = vmatprep.subr.mxu0 0.0
    %1131 = vmatpush1.msra.mxu0 0.0
    %1132 = vmatprep.subr.mxu0 0.0
    %1133 = vmatpush1.msra.mxu0 0.0
    %1134 = vmatprep.subr.mxu0 0.0
    %1135 = vmatpush1.msra.mxu0 0.0
    %1136 = vmatprep.subr.mxu0 0.0
    %1137 = vmatpush1.msra.mxu0 0.0
    %1138 = vmatprep.subr.mxu0 0.0
    %1139 = vmatpush1.msra.mxu0 0.0
    %1140 = vmatprep.mubr.f32.mxu0 0.0
    %1141 = vmatmul.mubr.f32.gmra.mrb[0].mxu0 %v1071
    %v1142 = vpop.f32.mrb[0].mxu0
    %v1143 = vadd.f32 0.0, %v1142
    %v1144 = vpop.f32.mrb[0].mxu0
    %1145 = vmatprep.mubr.f32.mxu0 0.0
    %1146 = vmatmul.mubr.f32.gmra.mrb[0].mxu0 %v1074
    %v1147 = vpop.f32.mrb[0].mxu0
    %v1148 = vadd.f32 0.0, %v1147
    %v1149 = vpop.f32.mrb[0].mxu0
    %1150 = vdwg.mxu0
    %1151 = vrot.lane.b32.xlu0 %v154, 64
    %v1152 = vpop.permute.xlu0 %1151
    %1153 = vrot.lane.b32.xlu0 %v159, 64
    %v1154 = vpop.permute.xlu0 %1153
    %v1158 = vsel %vm887, %v1050, 0
    %v1161 = vsel %vm887, %v1051, 0
    %1163 = vmatprep.subr.mxu0 0.0
    %1164 = vmatpush1.msra.mxu0 %v1152
    %1165 = vmatprep.subr.mxu0 0.0
    %1166 = vmatpush1.msra.mxu0 %v1154
    %1167 = vmatprep.subr.mxu0 0.0
    %1168 = vmatpush1.msra.mxu0 0.0
    %1169 = vmatprep.subr.mxu0 0.0
    %1170 = vmatpush1.msra.mxu0 0.0
    %1171 = vmatprep.subr.mxu0 0.0
    %1172 = vmatpush1.msra.mxu0 0.0
    %1173 = vmatprep.subr.mxu0 0.0
    %1174 = vmatpush1.msra.mxu0 0.0
    %1175 = vmatprep.subr.mxu0 0.0
    %1176 = vmatpush1.msra.mxu0 0.0
    %1177 = vmatprep.subr.mxu0 0.0
    %1178 = vmatpush1.msra.mxu0 0.0
    %1179 = vmatprep.subr.mxu0 0.0
    %1180 = vmatpush1.msra.mxu0 0.0
    %1181 = vmatprep.subr.mxu0 0.0
    %1182 = vmatpush1.msra.mxu0 0.0
    %1183 = vmatprep.subr.mxu0 0.0
    %1184 = vmatpush1.msra.mxu0 0.0
    %1185 = vmatprep.subr.mxu0 0.0
    %1186 = vmatpush1.msra.mxu0 0.0
    %1187 = vmatprep.subr.mxu0 0.0
    %1188 = vmatpush1.msra.mxu0 0.0
    %1189 = vmatprep.subr.mxu0 0.0
    %1190 = vmatpush1.msra.mxu0 0.0
    %1191 = vmatprep.subr.mxu0 0.0
    %1192 = vmatpush1.msra.mxu0 0.0
    %1193 = vmatprep.subr.mxu0 0.0
    %1194 = vmatpush1.msra.mxu0 0.0
    %1195 = vmatprep.subr.mxu0 0.0
    %1196 = vmatpush1.msra.mxu0 0.0
    %1197 = vmatprep.subr.mxu0 0.0
    %1198 = vmatpush1.msra.mxu0 0.0
    %1199 = vmatprep.subr.mxu0 0.0
    %1200 = vmatpush1.msra.mxu0 0.0
    %1201 = vmatprep.subr.mxu0 0.0
    %1202 = vmatpush1.msra.mxu0 0.0
    %1203 = vmatprep.subr.mxu0 0.0
    %1204 = vmatpush1.msra.mxu0 0.0
    %1205 = vmatprep.subr.mxu0 0.0
    %1206 = vmatpush1.msra.mxu0 0.0
    %1207 = vmatprep.subr.mxu0 0.0
    %1208 = vmatpush1.msra.mxu0 0.0
    %1209 = vmatprep.subr.mxu0 0.0
    %1210 = vmatpush1.msra.mxu0 0.0
    %1211 = vmatprep.subr.mxu0 0.0
    %1212 = vmatpush1.msra.mxu0 0.0
    %1213 = vmatprep.subr.mxu0 0.0
    %1214 = vmatpush1.msra.mxu0 0.0
    %1215 = vmatprep.subr.mxu0 0.0
    %1216 = vmatpush1.msra.mxu0 0.0
    %1217 = vmatprep.subr.mxu0 0.0
    %1218 = vmatpush1.msra.mxu0 0.0
    %1219 = vmatprep.subr.mxu0 0.0
    %1220 = vmatpush1.msra.mxu0 0.0
    %1221 = vmatprep.subr.mxu0 0.0
    %1222 = vmatpush1.msra.mxu0 0.0
    %1223 = vmatprep.subr.mxu0 0.0
    %1224 = vmatpush1.msra.mxu0 0.0
    %1225 = vmatprep.subr.mxu0 0.0
    %1226 = vmatpush1.msra.mxu0 0.0
    %1227 = vmatprep.mubr.f32.mxu0 0.0
    %1228 = vmatmul.mubr.f32.gmra.mrb[0].mxu0 %v1158
    %v1229 = vpop.f32.mrb[0].mxu0
    %v1230 = vadd.f32 0.0, %v1229
    %v1231 = vpop.f32.mrb[0].mxu0
    %1232 = vmatprep.mubr.f32.mxu0 0.0
    %1233 = vmatmul.mubr.f32.gmra.mrb[0].mxu0 %v1161
    %v1234 = vpop.f32.mrb[0].mxu0
    %v1235 = vadd.f32 0.0, %v1234
    %v1236 = vpop.f32.mrb[0].mxu0
    %1237 = vdwg.mxu0
    %1238 = vrot.lane.b32.xlu0 %v167, 64
    %v1239 = vpop.permute.xlu0 %1238
    %1240 = vrot.lane.b32.xlu0 %v169, 64
    %v1241 = vpop.permute.xlu0 %1240
    %v1245 = vsel %vm887, %v1052, 0
    %v1248 = vsel %vm887, %v1053, 0
    %1250 = vmatprep.subr.mxu0 0.0
    %1251 = vmatpush1.msra.mxu0 %v1239
    %1252 = vmatprep.subr.mxu0 0.0
    %1253 = vmatpush1.msra.mxu0 %v1241
    %1254 = vmatprep.subr.mxu0 0.0
    %1255 = vmatpush1.msra.mxu0 0.0
    %1256 = vmatprep.subr.mxu0 0.0
    %1257 = vmatpush1.msra.mxu0 0.0
    %1258 = vmatprep.subr.mxu0 0.0
    %1259 = vmatpush1.msra.mxu0 0.0
    %1260 = vmatprep.subr.mxu0 0.0
    %1261 = vmatpush1.msra.mxu0 0.0
    %1262 = vmatprep.subr.mxu0 0.0
    %1263 = vmatpush1.msra.mxu0 0.0
    %1264 = vmatprep.subr.mxu0 0.0
    %1265 = vmatpush1.msra.mxu0 0.0
    %1266 = vmatprep.subr.mxu0 0.0
    %1267 = vmatpush1.msra.mxu0 0.0
    %1268 = vmatprep.subr.mxu0 0.0
    %1269 = vmatpush1.msra.mxu0 0.0
    %1270 = vmatprep.subr.mxu0 0.0
    %1271 = vmatpush1.msra.mxu0 0.0
    %1272 = vmatprep.subr.mxu0 0.0
    %1273 = vmatpush1.msra.mxu0 0.0
    %1274 = vmatprep.subr.mxu0 0.0
    %1275 = vmatpush1.msra.mxu0 0.0
    %1276 = vmatprep.subr.mxu0 0.0
    %1277 = vmatpush1.msra.mxu0 0.0
    %1278 = vmatprep.subr.mxu0 0.0
    %1279 = vmatpush1.msra.mxu0 0.0
    %1280 = vmatprep.subr.mxu0 0.0
    %1281 = vmatpush1.msra.mxu0 0.0
    %1282 = vmatprep.subr.mxu0 0.0
    %1283 = vmatpush1.msra.mxu0 0.0
    %1284 = vmatprep.subr.mxu0 0.0
    %1285 = vmatpush1.msra.mxu0 0.0
    %1286 = vmatprep.subr.mxu0 0.0
    %1287 = vmatpush1.msra.mxu0 0.0
    %1288 = vmatprep.subr.mxu0 0.0
    %1289 = vmatpush1.msra.mxu0 0.0
    %1290 = vmatprep.subr.mxu0 0.0
    %1291 = vmatpush1.msra.mxu0 0.0
    %1292 = vmatprep.subr.mxu0 0.0
    %1293 = vmatpush1.msra.mxu0 0.0
    %1294 = vmatprep.subr.mxu0 0.0
    %1295 = vmatpush1.msra.mxu0 0.0
    %1296 = vmatprep.subr.mxu0 0.0
    %1297 = vmatpush1.msra.mxu0 0.0
    %1298 = vmatprep.subr.mxu0 0.0
    %1299 = vmatpush1.msra.mxu0 0.0
    %1300 = vmatprep.subr.mxu0 0.0
    %1301 = vmatpush1.msra.mxu0 0.0
    %1302 = vmatprep.subr.mxu0 0.0
    %1303 = vmatpush1.msra.mxu0 0.0
    %1304 = vmatprep.subr.mxu0 0.0
    %1305 = vmatpush1.msra.mxu0 0.0
    %1306 = vmatprep.subr.mxu0 0.0
    %1307 = vmatpush1.msra.mxu0 0.0
    %1308 = vmatprep.subr.mxu0 0.0
    %1309 = vmatpush1.msra.mxu0 0.0
    %1310 = vmatprep.subr.mxu0 0.0
    %1311 = vmatpush1.msra.mxu0 0.0
    %1312 = vmatprep.subr.mxu0 0.0
    %1313 = vmatpush1.msra.mxu0 0.0
    %1314 = vmatprep.mubr.f32.mxu0 0.0
    %1315 = vmatmul.mubr.f32.gmra.mrb[0].mxu0 %v1245
    %v1316 = vpop.f32.mrb[0].mxu0
    %v1317 = vadd.f32 0.0, %v1316
    %v1318 = vpop.f32.mrb[0].mxu0
    %1319 = vmatprep.mubr.f32.mxu0 0.0
    %1320 = vmatmul.mubr.f32.gmra.mrb[0].mxu0 %v1248
    %v1321 = vpop.f32.mrb[0].mxu0
    %v1322 = vadd.f32 0.0, %v1321
    %v1323 = vpop.f32.mrb[0].mxu0
    %1324 = vdwg.mxu0
    %1325 = vrot.lane.b32.xlu0 %v171, 64
    %v1326 = vpop.permute.xlu0 %1325
    %1327 = vrot.lane.b32.xlu0 %v173, 64
    %v1328 = vpop.permute.xlu0 %1327
    %v1332 = vsel %vm887, %v1054, 0
    %v1335 = vsel %vm887, %v1055, 0
    %1337 = vmatprep.subr.mxu0 0.0
    %1338 = vmatpush1.msra.mxu0 %v1326
    %1339 = vmatprep.subr.mxu0 0.0
    %1340 = vmatpush1.msra.mxu0 %v1328
    %1341 = vmatprep.subr.mxu0 0.0
    %1342 = vmatpush1.msra.mxu0 0.0
    %1343 = vmatprep.subr.mxu0 0.0
    %1344 = vmatpush1.msra.mxu0 0.0
    %1345 = vmatprep.subr.mxu0 0.0
    %1346 = vmatpush1.msra.mxu0 0.0
    %1347 = vmatprep.subr.mxu0 0.0
    %1348 = vmatpush1.msra.mxu0 0.0
    %1349 = vmatprep.subr.mxu0 0.0
    %1350 = vmatpush1.msra.mxu0 0.0
    %1351 = vmatprep.subr.mxu0 0.0
    %1352 = vmatpush1.msra.mxu0 0.0
    %1353 = vmatprep.subr.mxu0 0.0
    %1354 = vmatpush1.msra.mxu0 0.0
    %1355 = vmatprep.subr.mxu0 0.0
    %1356 = vmatpush1.msra.mxu0 0.0
    %1357 = vmatprep.subr.mxu0 0.0
    %1358 = vmatpush1.msra.mxu0 0.0
    %1359 = vmatprep.subr.mxu0 0.0
    %1360 = vmatpush1.msra.mxu0 0.0
    %1361 = vmatprep.subr.mxu0 0.0
    %1362 = vmatpush1.msra.mxu0 0.0
    %1363 = vmatprep.subr.mxu0 0.0
    %1364 = vmatpush1.msra.mxu0 0.0
    %1365 = vmatprep.subr.mxu0 0.0
    %1366 = vmatpush1.msra.mxu0 0.0
    %1367 = vmatprep.subr.mxu0 0.0
    %1368 = vmatpush1.msra.mxu0 0.0
    %1369 = vmatprep.subr.mxu0 0.0
    %1370 = vmatpush1.msra.mxu0 0.0
    %1371 = vmatprep.subr.mxu0 0.0
    %1372 = vmatpush1.msra.mxu0 0.0
    %1373 = vmatprep.subr.mxu0 0.0
    %1374 = vmatpush1.msra.mxu0 0.0
    %1375 = vmatprep.subr.mxu0 0.0
    %1376 = vmatpush1.msra.mxu0 0.0
    %1377 = vmatprep.subr.mxu0 0.0
    %1378 = vmatpush1.msra.mxu0 0.0
    %1379 = vmatprep.subr.mxu0 0.0
    %1380 = vmatpush1.msra.mxu0 0.0
    %1381 = vmatprep.subr.mxu0 0.0
    %1382 = vmatpush1.msra.mxu0 0.0
    %1383 = vmatprep.subr.mxu0 0.0
    %1384 = vmatpush1.msra.mxu0 0.0
    %1385 = vmatprep.subr.mxu0 0.0
    %1386 = vmatpush1.msra.mxu0 0.0
    %1387 = vmatprep.subr.mxu0 0.0
    %1388 = vmatpush1.msra.mxu0 0.0
    %1389 = vmatprep.subr.mxu0 0.0
    %1390 = vmatpush1.msra.mxu0 0.0
    %1391 = vmatprep.subr.mxu0 0.0
    %1392 = vmatpush1.msra.mxu0 0.0
    %1393 = vmatprep.subr.mxu0 0.0
    %1394 = vmatpush1.msra.mxu0 0.0
    %1395 = vmatprep.subr.mxu0 0.0
    %1396 = vmatpush1.msra.mxu0 0.0
    %1397 = vmatprep.subr.mxu0 0.0
    %1398 = vmatpush1.msra.mxu0 0.0
    %1399 = vmatprep.subr.mxu0 0.0
    %1400 = vmatpush1.msra.mxu0 0.0
    %1401 = vmatprep.mubr.f32.mxu0 0.0
    %1402 = vmatmul.mubr.f32.gmra.mrb[0].mxu0 %v1332
    %v1403 = vpop.f32.mrb[0].mxu0
    %v1404 = vadd.f32 0.0, %v1403
    %v1405 = vpop.f32.mrb[0].mxu0
    %1406 = vmatprep.mubr.f32.mxu0 0.0
    %1407 = vmatmul.mubr.f32.gmra.mrb[0].mxu0 %v1335
    %v1408 = vpop.f32.mrb[0].mxu0
    %v1409 = vadd.f32 0.0, %v1408
    %v1410 = vpop.f32.mrb[0].mxu0
    %1411 = vdwg.mxu0
    %1412 = vrot.lane.b32.xlu0 %v175, 64
    %v1413 = vpop.permute.xlu0 %1412
    %1414 = vrot.lane.b32.xlu0 %v177, 64
    %v1415 = vpop.permute.xlu0 %1414
    %v1419 = vsel %vm887, %v1056, 0
    %v1422 = vsel %vm887, %v1057, 0
    %1424 = vmatprep.subr.mxu0 0.0
    %1425 = vmatpush1.msra.mxu0 %v1413
    %1426 = vmatprep.subr.mxu0 0.0
    %1427 = vmatpush1.msra.mxu0 %v1415
    %1428 = vmatprep.subr.mxu0 0.0
    %1429 = vmatpush1.msra.mxu0 0.0
    %1430 = vmatprep.subr.mxu0 0.0
    %1431 = vmatpush1.msra.mxu0 0.0
    %1432 = vmatprep.subr.mxu0 0.0
    %1433 = vmatpush1.msra.mxu0 0.0
    %1434 = vmatprep.subr.mxu0 0.0
    %1435 = vmatpush1.msra.mxu0 0.0
    %1436 = vmatprep.subr.mxu0 0.0
    %1437 = vmatpush1.msra.mxu0 0.0
    %1438 = vmatprep.subr.mxu0 0.0
    %1439 = vmatpush1.msra.mxu0 0.0
    %1440 = vmatprep.subr.mxu0 0.0
    %1441 = vmatpush1.msra.mxu0 0.0
    %1442 = vmatprep.subr.mxu0 0.0
    %1443 = vmatpush1.msra.mxu0 0.0
    %1444 = vmatprep.subr.mxu0 0.0
    %1445 = vmatpush1.msra.mxu0 0.0
    %1446 = vmatprep.subr.mxu0 0.0
    %1447 = vmatpush1.msra.mxu0 0.0
    %1448 = vmatprep.subr.mxu0 0.0
    %1449 = vmatpush1.msra.mxu0 0.0
    %1450 = vmatprep.subr.mxu0 0.0
    %1451 = vmatpush1.msra.mxu0 0.0
    %1452 = vmatprep.subr.mxu0 0.0
    %1453 = vmatpush1.msra.mxu0 0.0
    %1454 = vmatprep.subr.mxu0 0.0
    %1455 = vmatpush1.msra.mxu0 0.0
    %1456 = vmatprep.subr.mxu0 0.0
    %1457 = vmatpush1.msra.mxu0 0.0
    %1458 = vmatprep.subr.mxu0 0.0
    %1459 = vmatpush1.msra.mxu0 0.0
    %1460 = vmatprep.subr.mxu0 0.0
    %1461 = vmatpush1.msra.mxu0 0.0
    %1462 = vmatprep.subr.mxu0 0.0
    %1463 = vmatpush1.msra.mxu0 0.0
    %1464 = vmatprep.subr.mxu0 0.0
    %1465 = vmatpush1.msra.mxu0 0.0
    %1466 = vmatprep.subr.mxu0 0.0
    %1467 = vmatpush1.msra.mxu0 0.0
    %1468 = vmatprep.subr.mxu0 0.0
    %1469 = vmatpush1.msra.mxu0 0.0
    %1470 = vmatprep.subr.mxu0 0.0
    %1471 = vmatpush1.msra.mxu0 0.0
    %1472 = vmatprep.subr.mxu0 0.0
    %1473 = vmatpush1.msra.mxu0 0.0
    %1474 = vmatprep.subr.mxu0 0.0
    %1475 = vmatpush1.msra.mxu0 0.0
    %1476 = vmatprep.subr.mxu0 0.0
    %1477 = vmatpush1.msra.mxu0 0.0
    %1478 = vmatprep.subr.mxu0 0.0
    %1479 = vmatpush1.msra.mxu0 0.0
    %1480 = vmatprep.subr.mxu0 0.0
    %1481 = vmatpush1.msra.mxu0 0.0
    %1482 = vmatprep.subr.mxu0 0.0
    %1483 = vmatpush1.msra.mxu0 0.0
    %1484 = vmatprep.subr.mxu0 0.0
    %1485 = vmatpush1.msra.mxu0 0.0
    %1486 = vmatprep.subr.mxu0 0.0
    %1487 = vmatpush1.msra.mxu0 0.0
    %1488 = vmatprep.mubr.f32.mxu0 0.0
    %1489 = vmatmul.mubr.f32.gmra.mrb[0].mxu0 %v1419
    %v1490 = vpop.f32.mrb[0].mxu0
    %v1491 = vadd.f32 0.0, %v1490
    %v1492 = vpop.f32.mrb[0].mxu0
    %1493 = vmatprep.mubr.f32.mxu0 0.0
    %1494 = vmatmul.mubr.f32.gmra.mrb[0].mxu0 %v1422
    %v1495 = vpop.f32.mrb[0].mxu0
    %v1496 = vadd.f32 0.0, %v1495
    %v1497 = vpop.f32.mrb[0].mxu0
    %1498 = vdwg.mxu0
    %1499 = vrot.lane.b32.xlu0 %v179, 64
    %v1500 = vpop.permute.xlu0 %1499
    %1501 = vrot.lane.b32.xlu0 %v181, 64
    %v1502 = vpop.permute.xlu0 %1501
    %v1506 = vsel %vm887, %v1058, 0
    %v1509 = vsel %vm887, %v1059, 0
    %1511 = vmatprep.subr.mxu0 0.0
    %1512 = vmatpush1.msra.mxu0 %v1500
    %1513 = vmatprep.subr.mxu0 0.0
    %1514 = vmatpush1.msra.mxu0 %v1502
    %1515 = vmatprep.subr.mxu0 0.0
    %1516 = vmatpush1.msra.mxu0 0.0
    %1517 = vmatprep.subr.mxu0 0.0
    %1518 = vmatpush1.msra.mxu0 0.0
    %1519 = vmatprep.subr.mxu0 0.0
    %1520 = vmatpush1.msra.mxu0 0.0
    %1521 = vmatprep.subr.mxu0 0.0
    %1522 = vmatpush1.msra.mxu0 0.0
    %1523 = vmatprep.subr.mxu0 0.0
    %1524 = vmatpush1.msra.mxu0 0.0
    %1525 = vmatprep.subr.mxu0 0.0
    %1526 = vmatpush1.msra.mxu0 0.0
    %1527 = vmatprep.subr.mxu0 0.0
    %1528 = vmatpush1.msra.mxu0 0.0
    %1529 = vmatprep.subr.mxu0 0.0
    %1530 = vmatpush1.msra.mxu0 0.0
    %1531 = vmatprep.subr.mxu0 0.0
    %1532 = vmatpush1.msra.mxu0 0.0
    %1533 = vmatprep.subr.mxu0 0.0
    %1534 = vmatpush1.msra.mxu0 0.0
    %1535 = vmatprep.subr.mxu0 0.0
    %1536 = vmatpush1.msra.mxu0 0.0
    %1537 = vmatprep.subr.mxu0 0.0
    %1538 = vmatpush1.msra.mxu0 0.0
    %1539 = vmatprep.subr.mxu0 0.0
    %1540 = vmatpush1.msra.mxu0 0.0
    %1541 = vmatprep.subr.mxu0 0.0
    %1542 = vmatpush1.msra.mxu0 0.0
    %1543 = vmatprep.subr.mxu0 0.0
    %1544 = vmatpush1.msra.mxu0 0.0
    %1545 = vmatprep.subr.mxu0 0.0
    %1546 = vmatpush1.msra.mxu0 0.0
    %1547 = vmatprep.subr.mxu0 0.0
    %1548 = vmatpush1.msra.mxu0 0.0
    %1549 = vmatprep.subr.mxu0 0.0
    %1550 = vmatpush1.msra.mxu0 0.0
    %1551 = vmatprep.subr.mxu0 0.0
    %1552 = vmatpush1.msra.mxu0 0.0
    %1553 = vmatprep.subr.mxu0 0.0
    %1554 = vmatpush1.msra.mxu0 0.0
    %1555 = vmatprep.subr.mxu0 0.0
    %1556 = vmatpush1.msra.mxu0 0.0
    %1557 = vmatprep.subr.mxu0 0.0
    %1558 = vmatpush1.msra.mxu0 0.0
    %1559 = vmatprep.subr.mxu0 0.0
    %1560 = vmatpush1.msra.mxu0 0.0
    %1561 = vmatprep.subr.mxu0 0.0
    %1562 = vmatpush1.msra.mxu0 0.0
    %1563 = vmatprep.subr.mxu0 0.0
    %1564 = vmatpush1.msra.mxu0 0.0
    %1565 = vmatprep.subr.mxu0 0.0
    %1566 = vmatpush1.msra.mxu0 0.0
    %1567 = vmatprep.subr.mxu0 0.0
    %1568 = vmatpush1.msra.mxu0 0.0
    %1569 = vmatprep.subr.mxu0 0.0
    %1570 = vmatpush1.msra.mxu0 0.0
    %1571 = vmatprep.subr.mxu0 0.0
    %1572 = vmatpush1.msra.mxu0 0.0
    %1573 = vmatprep.subr.mxu0 0.0
    %1574 = vmatpush1.msra.mxu0 0.0
    %1575 = vmatprep.mubr.f32.mxu0 0.0
    %1576 = vmatmul.mubr.f32.gmra.mrb[0].mxu0 %v1506
    %v1577 = vpop.f32.mrb[0].mxu0
    %v1578 = vadd.f32 0.0, %v1577
    %v1579 = vpop.f32.mrb[0].mxu0
    %1580 = vmatprep.mubr.f32.mxu0 0.0
    %1581 = vmatmul.mubr.f32.gmra.mrb[0].mxu0 %v1509
    %v1582 = vpop.f32.mrb[0].mxu0
    %v1583 = vadd.f32 0.0, %v1582
    %v1584 = vpop.f32.mrb[0].mxu0
    %1585 = vdwg.mxu0
    %1586 = vrot.lane.b32.xlu0 %v183, 64
    %v1587 = vpop.permute.xlu0 %1586
    %1588 = vrot.lane.b32.xlu0 %v185, 64
    %v1589 = vpop.permute.xlu0 %1588
    %v1593 = vsel %vm887, %v1060, 0
    %v1596 = vsel %vm887, %v1061, 0
    %1598 = vmatprep.subr.mxu0 0.0
    %1599 = vmatpush1.msra.mxu0 %v1587
    %1600 = vmatprep.subr.mxu0 0.0
    %1601 = vmatpush1.msra.mxu0 %v1589
    %1602 = vmatprep.subr.mxu0 0.0
    %1603 = vmatpush1.msra.mxu0 0.0
    %1604 = vmatprep.subr.mxu0 0.0
    %1605 = vmatpush1.msra.mxu0 0.0
    %1606 = vmatprep.subr.mxu0 0.0
    %1607 = vmatpush1.msra.mxu0 0.0
    %1608 = vmatprep.subr.mxu0 0.0
    %1609 = vmatpush1.msra.mxu0 0.0
    %1610 = vmatprep.subr.mxu0 0.0
    %1611 = vmatpush1.msra.mxu0 0.0
    %1612 = vmatprep.subr.mxu0 0.0
    %1613 = vmatpush1.msra.mxu0 0.0
    %1614 = vmatprep.subr.mxu0 0.0
    %1615 = vmatpush1.msra.mxu0 0.0
    %1616 = vmatprep.subr.mxu0 0.0
    %1617 = vmatpush1.msra.mxu0 0.0
    %1618 = vmatprep.subr.mxu0 0.0
    %1619 = vmatpush1.msra.mxu0 0.0
    %1620 = vmatprep.subr.mxu0 0.0
    %1621 = vmatpush1.msra.mxu0 0.0
    %1622 = vmatprep.subr.mxu0 0.0
    %1623 = vmatpush1.msra.mxu0 0.0
    %1624 = vmatprep.subr.mxu0 0.0
    %1625 = vmatpush1.msra.mxu0 0.0
    %1626 = vmatprep.subr.mxu0 0.0
    %1627 = vmatpush1.msra.mxu0 0.0
    %1628 = vmatprep.subr.mxu0 0.0
    %1629 = vmatpush1.msra.mxu0 0.0
    %1630 = vmatprep.subr.mxu0 0.0
    %1631 = vmatpush1.msra.mxu0 0.0
    %1632 = vmatprep.subr.mxu0 0.0
    %1633 = vmatpush1.msra.mxu0 0.0
    %1634 = vmatprep.subr.mxu0 0.0
    %1635 = vmatpush1.msra.mxu0 0.0
    %1636 = vmatprep.subr.mxu0 0.0
    %1637 = vmatpush1.msra.mxu0 0.0
    %1638 = vmatprep.subr.mxu0 0.0
    %1639 = vmatpush1.msra.mxu0 0.0
    %1640 = vmatprep.subr.mxu0 0.0
    %1641 = vmatpush1.msra.mxu0 0.0
    %1642 = vmatprep.subr.mxu0 0.0
    %1643 = vmatpush1.msra.mxu0 0.0
    %1644 = vmatprep.subr.mxu0 0.0
    %1645 = vmatpush1.msra.mxu0 0.0
    %1646 = vmatprep.subr.mxu0 0.0
    %1647 = vmatpush1.msra.mxu0 0.0
    %1648 = vmatprep.subr.mxu0 0.0
    %1649 = vmatpush1.msra.mxu0 0.0
    %1650 = vmatprep.subr.mxu0 0.0
    %1651 = vmatpush1.msra.mxu0 0.0
    %1652 = vmatprep.subr.mxu0 0.0
    %1653 = vmatpush1.msra.mxu0 0.0
    %1654 = vmatprep.subr.mxu0 0.0
    %1655 = vmatpush1.msra.mxu0 0.0
    %1656 = vmatprep.subr.mxu0 0.0
    %1657 = vmatpush1.msra.mxu0 0.0
    %1658 = vmatprep.subr.mxu0 0.0
    %1659 = vmatpush1.msra.mxu0 0.0
    %1660 = vmatprep.subr.mxu0 0.0
    %1661 = vmatpush1.msra.mxu0 0.0
    %1662 = vmatprep.mubr.f32.mxu0 0.0
    %1663 = vmatmul.mubr.f32.gmra.mrb[0].mxu0 %v1593
    %v1664 = vpop.f32.mrb[0].mxu0
    %v1665 = vadd.f32 0.0, %v1664
    %v1666 = vpop.f32.mrb[0].mxu0
    %1667 = vmatprep.mubr.f32.mxu0 0.0
    %1668 = vmatmul.mubr.f32.gmra.mrb[0].mxu0 %v1596
    %v1669 = vpop.f32.mrb[0].mxu0
    %v1670 = vadd.f32 0.0, %v1669
    %v1671 = vpop.f32.mrb[0].mxu0
    %1672 = vdwg.mxu0
    %1673 = vrot.lane.b32.xlu0 %v187, 64
    %v1674 = vpop.permute.xlu0 %1673
    %1675 = vrot.lane.b32.xlu0 %v189, 64
    %v1676 = vpop.permute.xlu0 %1675
    %v1680 = vsel %vm887, %v1062, 0
    %v1683 = vsel %vm887, %v1063, 0
    %1685 = vmatprep.subr.mxu0 0.0
    %1686 = vmatpush1.msra.mxu0 %v1674
    %1687 = vmatprep.subr.mxu0 0.0
    %1688 = vmatpush1.msra.mxu0 %v1676
    %1689 = vmatprep.subr.mxu0 0.0
    %1690 = vmatpush1.msra.mxu0 0.0
    %1691 = vmatprep.subr.mxu0 0.0
    %1692 = vmatpush1.msra.mxu0 0.0
    %1693 = vmatprep.subr.mxu0 0.0
    %1694 = vmatpush1.msra.mxu0 0.0
    %1695 = vmatprep.subr.mxu0 0.0
    %1696 = vmatpush1.msra.mxu0 0.0
    %1697 = vmatprep.subr.mxu0 0.0
    %1698 = vmatpush1.msra.mxu0 0.0
    %1699 = vmatprep.subr.mxu0 0.0
    %1700 = vmatpush1.msra.mxu0 0.0
    %1701 = vmatprep.subr.mxu0 0.0
    %1702 = vmatpush1.msra.mxu0 0.0
    %1703 = vmatprep.subr.mxu0 0.0
    %1704 = vmatpush1.msra.mxu0 0.0
    %1705 = vmatprep.subr.mxu0 0.0
    %1706 = vmatpush1.msra.mxu0 0.0
    %1707 = vmatprep.subr.mxu0 0.0
    %1708 = vmatpush1.msra.mxu0 0.0
    %1709 = vmatprep.subr.mxu0 0.0
    %1710 = vmatpush1.msra.mxu0 0.0
    %1711 = vmatprep.subr.mxu0 0.0
    %1712 = vmatpush1.msra.mxu0 0.0
    %1713 = vmatprep.subr.mxu0 0.0
    %1714 = vmatpush1.msra.mxu0 0.0
    %1715 = vmatprep.subr.mxu0 0.0
    %1716 = vmatpush1.msra.mxu0 0.0
    %1717 = vmatprep.subr.mxu0 0.0
    %1718 = vmatpush1.msra.mxu0 0.0
    %1719 = vmatprep.subr.mxu0 0.0
    %1720 = vmatpush1.msra.mxu0 0.0
    %1721 = vmatprep.subr.mxu0 0.0
    %1722 = vmatpush1.msra.mxu0 0.0
    %1723 = vmatprep.subr.mxu0 0.0
    %1724 = vmatpush1.msra.mxu0 0.0
    %1725 = vmatprep.subr.mxu0 0.0
    %1726 = vmatpush1.msra.mxu0 0.0
    %1727 = vmatprep.subr.mxu0 0.0
    %1728 = vmatpush1.msra.mxu0 0.0
    %1729 = vmatprep.subr.mxu0 0.0
    %1730 = vmatpush1.msra.mxu0 0.0
    %1731 = vmatprep.subr.mxu0 0.0
    %1732 = vmatpush1.msra.mxu0 0.0
    %1733 = vmatprep.subr.mxu0 0.0
    %1734 = vmatpush1.msra.mxu0 0.0
    %1735 = vmatprep.subr.mxu0 0.0
    %1736 = vmatpush1.msra.mxu0 0.0
    %1737 = vmatprep.subr.mxu0 0.0
    %1738 = vmatpush1.msra.mxu0 0.0
    %1739 = vmatprep.subr.mxu0 0.0
    %1740 = vmatpush1.msra.mxu0 0.0
    %1741 = vmatprep.subr.mxu0 0.0
    %1742 = vmatpush1.msra.mxu0 0.0
    %1743 = vmatprep.subr.mxu0 0.0
    %1744 = vmatpush1.msra.mxu0 0.0
    %1745 = vmatprep.subr.mxu0 0.0
    %1746 = vmatpush1.msra.mxu0 0.0
    %1747 = vmatprep.subr.mxu0 0.0
    %1748 = vmatpush1.msra.mxu0 0.0
    %1749 = vmatprep.mubr.f32.mxu0 0.0
    %1750 = vmatmul.mubr.f32.gmra.mrb[0].mxu0 %v1680
    %v1751 = vpop.f32.mrb[0].mxu0
    %v1752 = vadd.f32 0.0, %v1751
    %v1753 = vpop.f32.mrb[0].mxu0
    %1754 = vmatprep.mubr.f32.mxu0 0.0
    %1755 = vmatmul.mubr.f32.gmra.mrb[0].mxu0 %v1683
    %v1756 = vpop.f32.mrb[0].mxu0
    %v1757 = vadd.f32 0.0, %v1756
    %v1758 = vpop.f32.mrb[0].mxu0
    %1759 = vdwg.mxu0
    %v1760 = vld [vmem:[#allocation7] sm:$0xff]
    %v1761 = vld [vmem:[#allocation7 + $0x8] sm:$0xff]
    %v1762 = vld [vmem:[#allocation7 + $0x10] sm:$0xff]
    %v1763 = vld [vmem:[#allocation7 + $0x18] sm:$0xff]
    %v1764 = vld [vmem:[#allocation7 + $0x20] sm:$0xff]
    %v1765 = vld [vmem:[#allocation7 + $0x28] sm:$0xff]
    %v1766 = vld [vmem:[#allocation7 + $0x30] sm:$0xff]
    %v1767 = vld [vmem:[#allocation7 + $0x38] sm:$0xff]
    %v1769 = vsel %vm194, %v1143, 0
    %v1772 = vsel %vm194, %v1148, 0
    %1774 = vmatprep.subr.mxu0 0.0
    %1775 = vmatpush1.msra.mxu0 %v1760
    %1776 = vmatprep.subr.mxu0 0.0
    %1777 = vmatpush1.msra.mxu0 0.0
    %1778 = vmatprep.subr.mxu0 0.0
    %1779 = vmatpush1.msra.mxu0 0.0
    %1780 = vmatprep.subr.mxu0 0.0
    %1781 = vmatpush1.msra.mxu0 0.0
    %1782 = vmatprep.subr.mxu0 0.0
    %1783 = vmatpush1.msra.mxu0 0.0
    %1784 = vmatprep.subr.mxu0 0.0
    %1785 = vmatpush1.msra.mxu0 0.0
    %1786 = vmatprep.subr.mxu0 0.0
    %1787 = vmatpush1.msra.mxu0 0.0
    %1788 = vmatprep.subr.mxu0 0.0
    %1789 = vmatpush1.msra.mxu0 0.0
    %1790 = vmatprep.subr.mxu0 0.0
    %1791 = vmatpush1.msra.mxu0 0.0
    %1792 = vmatprep.subr.mxu0 0.0
    %1793 = vmatpush1.msra.mxu0 0.0
    %1794 = vmatprep.subr.mxu0 0.0
    %1795 = vmatpush1.msra.mxu0 0.0
    %1796 = vmatprep.subr.mxu0 0.0
    %1797 = vmatpush1.msra.mxu0 0.0
    %1798 = vmatprep.subr.mxu0 0.0
    %1799 = vmatpush1.msra.mxu0 0.0
    %1800 = vmatprep.subr.mxu0 0.0
    %1801 = vmatpush1.msra.mxu0 0.0
    %1802 = vmatprep.subr.mxu0 0.0
    %1803 = vmatpush1.msra.mxu0 0.0
    %1804 = vmatprep.subr.mxu0 0.0
    %1805 = vmatpush1.msra.mxu0 0.0
    %1806 = vmatprep.subr.mxu0 0.0
    %1807 = vmatpush1.msra.mxu0 0.0
    %1808 = vmatprep.subr.mxu0 0.0
    %1809 = vmatpush1.msra.mxu0 0.0
    %1810 = vmatprep.subr.mxu0 0.0
    %1811 = vmatpush1.msra.mxu0 0.0
    %1812 = vmatprep.subr.mxu0 0.0
    %1813 = vmatpush1.msra.mxu0 0.0
    %1814 = vmatprep.subr.mxu0 0.0
    %1815 = vmatpush1.msra.mxu0 0.0
    %1816 = vmatprep.subr.mxu0 0.0
    %1817 = vmatpush1.msra.mxu0 0.0
    %1818 = vmatprep.subr.mxu0 0.0
    %1819 = vmatpush1.msra.mxu0 0.0
    %1820 = vmatprep.subr.mxu0 0.0
    %1821 = vmatpush1.msra.mxu0 0.0
    %1822 = vmatprep.subr.mxu0 0.0
    %1823 = vmatpush1.msra.mxu0 0.0
    %1824 = vmatprep.subr.mxu0 0.0
    %1825 = vmatpush1.msra.mxu0 0.0
    %1826 = vmatprep.subr.mxu0 0.0
    %1827 = vmatpush1.msra.mxu0 0.0
    %1828 = vmatprep.subr.mxu0 0.0
    %1829 = vmatpush1.msra.mxu0 0.0
    %1830 = vmatprep.subr.mxu0 0.0
    %1831 = vmatpush1.msra.mxu0 0.0
    %1832 = vmatprep.subr.mxu0 0.0
    %1833 = vmatpush1.msra.mxu0 0.0
    %1834 = vmatprep.subr.mxu0 0.0
    %1835 = vmatpush1.msra.mxu0 0.0
    %1836 = vmatprep.subr.mxu0 0.0
    %1837 = vmatpush1.msra.mxu0 0.0
    %1838 = vmatprep.mubr.f32.mxu0 0.0
    %1839 = vmatmul.mubr.f32.gmra.mrb[0].mxu0 %v1769
    %v1840 = vpop.f32.mrb[0].mxu0
    %v1841 = vadd.f32 0.0, %v1840
    %v1842 = vpop.f32.mrb[0].mxu0
    %1843 = vmatprep.mubr.f32.mxu0 0.0
    %1844 = vmatmul.mubr.f32.gmra.mrb[0].mxu0 %v1772
    %v1845 = vpop.f32.mrb[0].mxu0
    %v1846 = vadd.f32 0.0, %v1845
    %v1847 = vpop.f32.mrb[0].mxu0
    %1848 = vdwg.mxu0
    %v1850 = vsel %vm194, %v1230, 0
    %v1853 = vsel %vm194, %v1235, 0
    %1855 = vmatprep.subr.mxu0 0.0
    %1856 = vmatpush1.msra.mxu0 %v1761
    %1857 = vmatprep.subr.mxu0 0.0
    %1858 = vmatpush1.msra.mxu0 0.0
    %1859 = vmatprep.subr.mxu0 0.0
    %1860 = vmatpush1.msra.mxu0 0.0
    %1861 = vmatprep.subr.mxu0 0.0
    %1862 = vmatpush1.msra.mxu0 0.0
    %1863 = vmatprep.subr.mxu0 0.0
    %1864 = vmatpush1.msra.mxu0 0.0
    %1865 = vmatprep.subr.mxu0 0.0
    %1866 = vmatpush1.msra.mxu0 0.0
    %1867 = vmatprep.subr.mxu0 0.0
    %1868 = vmatpush1.msra.mxu0 0.0
    %1869 = vmatprep.subr.mxu0 0.0
    %1870 = vmatpush1.msra.mxu0 0.0
    %1871 = vmatprep.subr.mxu0 0.0
    %1872 = vmatpush1.msra.mxu0 0.0
    %1873 = vmatprep.subr.mxu0 0.0
    %1874 = vmatpush1.msra.mxu0 0.0
    %1875 = vmatprep.subr.mxu0 0.0
    %1876 = vmatpush1.msra.mxu0 0.0
    %1877 = vmatprep.subr.mxu0 0.0
    %1878 = vmatpush1.msra.mxu0 0.0
    %1879 = vmatprep.subr.mxu0 0.0
    %1880 = vmatpush1.msra.mxu0 0.0
    %1881 = vmatprep.subr.mxu0 0.0
    %1882 = vmatpush1.msra.mxu0 0.0
    %1883 = vmatprep.subr.mxu0 0.0
    %1884 = vmatpush1.msra.mxu0 0.0
    %1885 = vmatprep.subr.mxu0 0.0
    %1886 = vmatpush1.msra.mxu0 0.0
    %1887 = vmatprep.subr.mxu0 0.0
    %1888 = vmatpush1.msra.mxu0 0.0
    %1889 = vmatprep.subr.mxu0 0.0
    %1890 = vmatpush1.msra.mxu0 0.0
    %1891 = vmatprep.subr.mxu0 0.0
    %1892 = vmatpush1.msra.mxu0 0.0
    %1893 = vmatprep.subr.mxu0 0.0
    %1894 = vmatpush1.msra.mxu0 0.0
    %1895 = vmatprep.subr.mxu0 0.0
    %1896 = vmatpush1.msra.mxu0 0.0
    %1897 = vmatprep.subr.mxu0 0.0
    %1898 = vmatpush1.msra.mxu0 0.0
    %1899 = vmatprep.subr.mxu0 0.0
    %1900 = vmatpush1.msra.mxu0 0.0
    %1901 = vmatprep.subr.mxu0 0.0
    %1902 = vmatpush1.msra.mxu0 0.0
    %1903 = vmatprep.subr.mxu0 0.0
    %1904 = vmatpush1.msra.mxu0 0.0
    %1905 = vmatprep.subr.mxu0 0.0
    %1906 = vmatpush1.msra.mxu0 0.0
    %1907 = vmatprep.subr.mxu0 0.0
    %1908 = vmatpush1.msra.mxu0 0.0
    %1909 = vmatprep.subr.mxu0 0.0
    %1910 = vmatpush1.msra.mxu0 0.0
    %1911 = vmatprep.subr.mxu0 0.0
    %1912 = vmatpush1.msra.mxu0 0.0
    %1913 = vmatprep.subr.mxu0 0.0
    %1914 = vmatpush1.msra.mxu0 0.0
    %1915 = vmatprep.subr.mxu0 0.0
    %1916 = vmatpush1.msra.mxu0 0.0
    %1917 = vmatprep.subr.mxu0 0.0
    %1918 = vmatpush1.msra.mxu0 0.0
    %1919 = vmatprep.mubr.f32.mxu0 0.0
    %1920 = vmatmul.mubr.f32.gmra.mrb[0].mxu0 %v1850
    %v1921 = vpop.f32.mrb[0].mxu0
    %v1922 = vadd.f32 0.0, %v1921
    %v1923 = vpop.f32.mrb[0].mxu0
    %1924 = vmatprep.mubr.f32.mxu0 0.0
    %1925 = vmatmul.mubr.f32.gmra.mrb[0].mxu0 %v1853
    %v1926 = vpop.f32.mrb[0].mxu0
    %v1927 = vadd.f32 0.0, %v1926
    %v1928 = vpop.f32.mrb[0].mxu0
    %1929 = vdwg.mxu0
    %v1931 = vsel %vm194, %v1317, 0
    %v1934 = vsel %vm194, %v1322, 0
    %1936 = vmatprep.subr.mxu0 0.0
    %1937 = vmatpush1.msra.mxu0 %v1762
    %1938 = vmatprep.subr.mxu0 0.0
    %1939 = vmatpush1.msra.mxu0 0.0
    %1940 = vmatprep.subr.mxu0 0.0
    %1941 = vmatpush1.msra.mxu0 0.0
    %1942 = vmatprep.subr.mxu0 0.0
    %1943 = vmatpush1.msra.mxu0 0.0
    %1944 = vmatprep.subr.mxu0 0.0
    %1945 = vmatpush1.msra.mxu0 0.0
    %1946 = vmatprep.subr.mxu0 0.0
    %1947 = vmatpush1.msra.mxu0 0.0
    %1948 = vmatprep.subr.mxu0 0.0
    %1949 = vmatpush1.msra.mxu0 0.0
    %1950 = vmatprep.subr.mxu0 0.0
    %1951 = vmatpush1.msra.mxu0 0.0
    %1952 = vmatprep.subr.mxu0 0.0
    %1953 = vmatpush1.msra.mxu0 0.0
    %1954 = vmatprep.subr.mxu0 0.0
    %1955 = vmatpush1.msra.mxu0 0.0
    %1956 = vmatprep.subr.mxu0 0.0
    %1957 = vmatpush1.msra.mxu0 0.0
    %1958 = vmatprep.subr.mxu0 0.0
    %1959 = vmatpush1.msra.mxu0 0.0
    %1960 = vmatprep.subr.mxu0 0.0
    %1961 = vmatpush1.msra.mxu0 0.0
    %1962 = vmatprep.subr.mxu0 0.0
    %1963 = vmatpush1.msra.mxu0 0.0
    %1964 = vmatprep.subr.mxu0 0.0
    %1965 = vmatpush1.msra.mxu0 0.0
    %1966 = vmatprep.subr.mxu0 0.0
    %1967 = vmatpush1.msra.mxu0 0.0
    %1968 = vmatprep.subr.mxu0 0.0
    %1969 = vmatpush1.msra.mxu0 0.0
    %1970 = vmatprep.subr.mxu0 0.0
    %1971 = vmatpush1.msra.mxu0 0.0
    %1972 = vmatprep.subr.mxu0 0.0
    %1973 = vmatpush1.msra.mxu0 0.0
    %1974 = vmatprep.subr.mxu0 0.0
    %1975 = vmatpush1.msra.mxu0 0.0
    %1976 = vmatprep.subr.mxu0 0.0
    %1977 = vmatpush1.msra.mxu0 0.0
    %1978 = vmatprep.subr.mxu0 0.0
    %1979 = vmatpush1.msra.mxu0 0.0
    %1980 = vmatprep.subr.mxu0 0.0
    %1981 = vmatpush1.msra.mxu0 0.0
    %1982 = vmatprep.subr.mxu0 0.0
    %1983 = vmatpush1.msra.mxu0 0.0
    %1984 = vmatprep.subr.mxu0 0.0
    %1985 = vmatpush1.msra.mxu0 0.0
    %1986 = vmatprep.subr.mxu0 0.0
    %1987 = vmatpush1.msra.mxu0 0.0
    %1988 = vmatprep.subr.mxu0 0.0
    %1989 = vmatpush1.msra.mxu0 0.0
    %1990 = vmatprep.subr.mxu0 0.0
    %1991 = vmatpush1.msra.mxu0 0.0
    %1992 = vmatprep.subr.mxu0 0.0
    %1993 = vmatpush1.msra.mxu0 0.0
    %1994 = vmatprep.subr.mxu0 0.0
    %1995 = vmatpush1.msra.mxu0 0.0
    %1996 = vmatprep.subr.mxu0 0.0
    %1997 = vmatpush1.msra.mxu0 0.0
    %1998 = vmatprep.subr.mxu0 0.0
    %1999 = vmatpush1.msra.mxu0 0.0
    %2000 = vmatprep.mubr.f32.mxu0 0.0
    %2001 = vmatmul.mubr.f32.gmra.mrb[0].mxu0 %v1931
    %v2002 = vpop.f32.mrb[0].mxu0
    %v2003 = vadd.f32 0.0, %v2002
    %v2004 = vpop.f32.mrb[0].mxu0
    %2005 = vmatprep.mubr.f32.mxu0 0.0
    %2006 = vmatmul.mubr.f32.gmra.mrb[0].mxu0 %v1934
    %v2007 = vpop.f32.mrb[0].mxu0
    %v2008 = vadd.f32 0.0, %v2007
    %v2009 = vpop.f32.mrb[0].mxu0
    %2010 = vdwg.mxu0
    %v2012 = vsel %vm194, %v1404, 0
    %v2015 = vsel %vm194, %v1409, 0
    %2017 = vmatprep.subr.mxu0 0.0
    %2018 = vmatpush1.msra.mxu0 %v1763
    %2019 = vmatprep.subr.mxu0 0.0
    %2020 = vmatpush1.msra.mxu0 0.0
    %2021 = vmatprep.subr.mxu0 0.0
    %2022 = vmatpush1.msra.mxu0 0.0
    %2023 = vmatprep.subr.mxu0 0.0
    %2024 = vmatpush1.msra.mxu0 0.0
    %2025 = vmatprep.subr.mxu0 0.0
    %2026 = vmatpush1.msra.mxu0 0.0
    %2027 = vmatprep.subr.mxu0 0.0
    %2028 = vmatpush1.msra.mxu0 0.0
    %2029 = vmatprep.subr.mxu0 0.0
    %2030 = vmatpush1.msra.mxu0 0.0
    %2031 = vmatprep.subr.mxu0 0.0
    %2032 = vmatpush1.msra.mxu0 0.0
    %2033 = vmatprep.subr.mxu0 0.0
    %2034 = vmatpush1.msra.mxu0 0.0
    %2035 = vmatprep.subr.mxu0 0.0
    %2036 = vmatpush1.msra.mxu0 0.0
    %2037 = vmatprep.subr.mxu0 0.0
    %2038 = vmatpush1.msra.mxu0 0.0
    %2039 = vmatprep.subr.mxu0 0.0
    %2040 = vmatpush1.msra.mxu0 0.0
    %2041 = vmatprep.subr.mxu0 0.0
    %2042 = vmatpush1.msra.mxu0 0.0
    %2043 = vmatprep.subr.mxu0 0.0
    %2044 = vmatpush1.msra.mxu0 0.0
    %2045 = vmatprep.subr.mxu0 0.0
    %2046 = vmatpush1.msra.mxu0 0.0
    %2047 = vmatprep.subr.mxu0 0.0
    %2048 = vmatpush1.msra.mxu0 0.0
    %2049 = vmatprep.subr.mxu0 0.0
    %2050 = vmatpush1.msra.mxu0 0.0
    %2051 = vmatprep.subr.mxu0 0.0
    %2052 = vmatpush1.msra.mxu0 0.0
    %2053 = vmatprep.subr.mxu0 0.0
    %2054 = vmatpush1.msra.mxu0 0.0
    %2055 = vmatprep.subr.mxu0 0.0
    %2056 = vmatpush1.msra.mxu0 0.0
    %2057 = vmatprep.subr.mxu0 0.0
    %2058 = vmatpush1.msra.mxu0 0.0
    %2059 = vmatprep.subr.mxu0 0.0
    %2060 = vmatpush1.msra.mxu0 0.0
    %2061 = vmatprep.subr.mxu0 0.0
    %2062 = vmatpush1.msra.mxu0 0.0
    %2063 = vmatprep.subr.mxu0 0.0
    %2064 = vmatpush1.msra.mxu0 0.0
    %2065 = vmatprep.subr.mxu0 0.0
    %2066 = vmatpush1.msra.mxu0 0.0
    %2067 = vmatprep.subr.mxu0 0.0
    %2068 = vmatpush1.msra.mxu0 0.0
    %2069 = vmatprep.subr.mxu0 0.0
    %2070 = vmatpush1.msra.mxu0 0.0
    %2071 = vmatprep.subr.mxu0 0.0
    %2072 = vmatpush1.msra.mxu0 0.0
    %2073 = vmatprep.subr.mxu0 0.0
    %2074 = vmatpush1.msra.mxu0 0.0
    %2075 = vmatprep.subr.mxu0 0.0
    %2076 = vmatpush1.msra.mxu0 0.0
    %2077 = vmatprep.subr.mxu0 0.0
    %2078 = vmatpush1.msra.mxu0 0.0
    %2079 = vmatprep.subr.mxu0 0.0
    %2080 = vmatpush1.msra.mxu0 0.0
    %2081 = vmatprep.mubr.f32.mxu0 0.0
    %2082 = vmatmul.mubr.f32.gmra.mrb[0].mxu0 %v2012
    %v2083 = vpop.f32.mrb[0].mxu0
    %v2084 = vadd.f32 0.0, %v2083
    %v2085 = vpop.f32.mrb[0].mxu0
    %2086 = vmatprep.mubr.f32.mxu0 0.0
    %2087 = vmatmul.mubr.f32.gmra.mrb[0].mxu0 %v2015
    %v2088 = vpop.f32.mrb[0].mxu0
    %v2089 = vadd.f32 0.0, %v2088
    %v2090 = vpop.f32.mrb[0].mxu0
    %2091 = vdwg.mxu0
    %v2093 = vsel %vm194, %v1491, 0
    %v2096 = vsel %vm194, %v1496, 0
    %2098 = vmatprep.subr.mxu0 0.0
    %2099 = vmatpush1.msra.mxu0 %v1764
    %2100 = vmatprep.subr.mxu0 0.0
    %2101 = vmatpush1.msra.mxu0 0.0
    %2102 = vmatprep.subr.mxu0 0.0
    %2103 = vmatpush1.msra.mxu0 0.0
    %2104 = vmatprep.subr.mxu0 0.0
    %2105 = vmatpush1.msra.mxu0 0.0
    %2106 = vmatprep.subr.mxu0 0.0
    %2107 = vmatpush1.msra.mxu0 0.0
    %2108 = vmatprep.subr.mxu0 0.0
    %2109 = vmatpush1.msra.mxu0 0.0
    %2110 = vmatprep.subr.mxu0 0.0
    %2111 = vmatpush1.msra.mxu0 0.0
    %2112 = vmatprep.subr.mxu0 0.0
    %2113 = vmatpush1.msra.mxu0 0.0
    %2114 = vmatprep.subr.mxu0 0.0
    %2115 = vmatpush1.msra.mxu0 0.0
    %2116 = vmatprep.subr.mxu0 0.0
    %2117 = vmatpush1.msra.mxu0 0.0
    %2118 = vmatprep.subr.mxu0 0.0
    %2119 = vmatpush1.msra.mxu0 0.0
    %2120 = vmatprep.subr.mxu0 0.0
    %2121 = vmatpush1.msra.mxu0 0.0
    %2122 = vmatprep.subr.mxu0 0.0
    %2123 = vmatpush1.msra.mxu0 0.0
    %2124 = vmatprep.subr.mxu0 0.0
    %2125 = vmatpush1.msra.mxu0 0.0
    %2126 = vmatprep.subr.mxu0 0.0
    %2127 = vmatpush1.msra.mxu0 0.0
    %2128 = vmatprep.subr.mxu0 0.0
    %2129 = vmatpush1.msra.mxu0 0.0
    %2130 = vmatprep.subr.mxu0 0.0
    %2131 = vmatpush1.msra.mxu0 0.0
    %2132 = vmatprep.subr.mxu0 0.0
    %2133 = vmatpush1.msra.mxu0 0.0
    %2134 = vmatprep.subr.mxu0 0.0
    %2135 = vmatpush1.msra.mxu0 0.0
    %2136 = vmatprep.subr.mxu0 0.0
    %2137 = vmatpush1.msra.mxu0 0.0
    %2138 = vmatprep.subr.mxu0 0.0
    %2139 = vmatpush1.msra.mxu0 0.0
    %2140 = vmatprep.subr.mxu0 0.0
    %2141 = vmatpush1.msra.mxu0 0.0
    %2142 = vmatprep.subr.mxu0 0.0
    %2143 = vmatpush1.msra.mxu0 0.0
    %2144 = vmatprep.subr.mxu0 0.0
    %2145 = vmatpush1.msra.mxu0 0.0
    %2146 = vmatprep.subr.mxu0 0.0
    %2147 = vmatpush1.msra.mxu0 0.0
    %2148 = vmatprep.subr.mxu0 0.0
    %2149 = vmatpush1.msra.mxu0 0.0
    %2150 = vmatprep.subr.mxu0 0.0
    %2151 = vmatpush1.msra.mxu0 0.0
    %2152 = vmatprep.subr.mxu0 0.0
    %2153 = vmatpush1.msra.mxu0 0.0
    %2154 = vmatprep.subr.mxu0 0.0
    %2155 = vmatpush1.msra.mxu0 0.0
    %2156 = vmatprep.subr.mxu0 0.0
    %2157 = vmatpush1.msra.mxu0 0.0
    %2158 = vmatprep.subr.mxu0 0.0
    %2159 = vmatpush1.msra.mxu0 0.0
    %2160 = vmatprep.subr.mxu0 0.0
    %2161 = vmatpush1.msra.mxu0 0.0
    %2162 = vmatprep.mubr.f32.mxu0 0.0
    %2163 = vmatmul.mubr.f32.gmra.mrb[0].mxu0 %v2093
    %v2164 = vpop.f32.mrb[0].mxu0
    %v2165 = vadd.f32 0.0, %v2164
    %v2166 = vpop.f32.mrb[0].mxu0
    %2167 = vmatprep.mubr.f32.mxu0 0.0
    %2168 = vmatmul.mubr.f32.gmra.mrb[0].mxu0 %v2096
    %v2169 = vpop.f32.mrb[0].mxu0
    %v2170 = vadd.f32 0.0, %v2169
    %v2171 = vpop.f32.mrb[0].mxu0
    %2172 = vdwg.mxu0
    %v2174 = vsel %vm194, %v1578, 0
    %v2177 = vsel %vm194, %v1583, 0
    %2179 = vmatprep.subr.mxu0 0.0
    %2180 = vmatpush1.msra.mxu0 %v1765
    %2181 = vmatprep.subr.mxu0 0.0
    %2182 = vmatpush1.msra.mxu0 0.0
    %2183 = vmatprep.subr.mxu0 0.0
    %2184 = vmatpush1.msra.mxu0 0.0
    %2185 = vmatprep.subr.mxu0 0.0
    %2186 = vmatpush1.msra.mxu0 0.0
    %2187 = vmatprep.subr.mxu0 0.0
    %2188 = vmatpush1.msra.mxu0 0.0
    %2189 = vmatprep.subr.mxu0 0.0
    %2190 = vmatpush1.msra.mxu0 0.0
    %2191 = vmatprep.subr.mxu0 0.0
    %2192 = vmatpush1.msra.mxu0 0.0
    %2193 = vmatprep.subr.mxu0 0.0
    %2194 = vmatpush1.msra.mxu0 0.0
    %2195 = vmatprep.subr.mxu0 0.0
    %2196 = vmatpush1.msra.mxu0 0.0
    %2197 = vmatprep.subr.mxu0 0.0
    %2198 = vmatpush1.msra.mxu0 0.0
    %2199 = vmatprep.subr.mxu0 0.0
    %2200 = vmatpush1.msra.mxu0 0.0
    %2201 = vmatprep.subr.mxu0 0.0
    %2202 = vmatpush1.msra.mxu0 0.0
    %2203 = vmatprep.subr.mxu0 0.0
    %2204 = vmatpush1.msra.mxu0 0.0
    %2205 = vmatprep.subr.mxu0 0.0
    %2206 = vmatpush1.msra.mxu0 0.0
    %2207 = vmatprep.subr.mxu0 0.0
    %2208 = vmatpush1.msra.mxu0 0.0
    %2209 = vmatprep.subr.mxu0 0.0
    %2210 = vmatpush1.msra.mxu0 0.0
    %2211 = vmatprep.subr.mxu0 0.0
    %2212 = vmatpush1.msra.mxu0 0.0
    %2213 = vmatprep.subr.mxu0 0.0
    %2214 = vmatpush1.msra.mxu0 0.0
    %2215 = vmatprep.subr.mxu0 0.0
    %2216 = vmatpush1.msra.mxu0 0.0
    %2217 = vmatprep.subr.mxu0 0.0
    %2218 = vmatpush1.msra.mxu0 0.0
    %2219 = vmatprep.subr.mxu0 0.0
    %2220 = vmatpush1.msra.mxu0 0.0
    %2221 = vmatprep.subr.mxu0 0.0
    %2222 = vmatpush1.msra.mxu0 0.0
    %2223 = vmatprep.subr.mxu0 0.0
    %2224 = vmatpush1.msra.mxu0 0.0
    %2225 = vmatprep.subr.mxu0 0.0
    %2226 = vmatpush1.msra.mxu0 0.0
    %2227 = vmatprep.subr.mxu0 0.0
    %2228 = vmatpush1.msra.mxu0 0.0
    %2229 = vmatprep.subr.mxu0 0.0
    %2230 = vmatpush1.msra.mxu0 0.0
    %2231 = vmatprep.subr.mxu0 0.0
    %2232 = vmatpush1.msra.mxu0 0.0
    %2233 = vmatprep.subr.mxu0 0.0
    %2234 = vmatpush1.msra.mxu0 0.0
    %2235 = vmatprep.subr.mxu0 0.0
    %2236 = vmatpush1.msra.mxu0 0.0
    %2237 = vmatprep.subr.mxu0 0.0
    %2238 = vmatpush1.msra.mxu0 0.0
    %2239 = vmatprep.subr.mxu0 0.0
    %2240 = vmatpush1.msra.mxu0 0.0
    %2241 = vmatprep.subr.mxu0 0.0
    %2242 = vmatpush1.msra.mxu0 0.0
    %2243 = vmatprep.mubr.f32.mxu0 0.0
    %2244 = vmatmul.mubr.f32.gmra.mrb[0].mxu0 %v2174
    %v2245 = vpop.f32.mrb[0].mxu0
    %v2246 = vadd.f32 0.0, %v2245
    %v2247 = vpop.f32.mrb[0].mxu0
    %2248 = vmatprep.mubr.f32.mxu0 0.0
    %2249 = vmatmul.mubr.f32.gmra.mrb[0].mxu0 %v2177
    %v2250 = vpop.f32.mrb[0].mxu0
    %v2251 = vadd.f32 0.0, %v2250
    %v2252 = vpop.f32.mrb[0].mxu0
    %2253 = vdwg.mxu0
    %v2255 = vsel %vm194, %v1665, 0
    %v2258 = vsel %vm194, %v1670, 0
    %2260 = vmatprep.subr.mxu0 0.0
    %2261 = vmatpush1.msra.mxu0 %v1766
    %2262 = vmatprep.subr.mxu0 0.0
    %2263 = vmatpush1.msra.mxu0 0.0
    %2264 = vmatprep.subr.mxu0 0.0
    %2265 = vmatpush1.msra.mxu0 0.0
    %2266 = vmatprep.subr.mxu0 0.0
    %2267 = vmatpush1.msra.mxu0 0.0
    %2268 = vmatprep.subr.mxu0 0.0
    %2269 = vmatpush1.msra.mxu0 0.0
    %2270 = vmatprep.subr.mxu0 0.0
    %2271 = vmatpush1.msra.mxu0 0.0
    %2272 = vmatprep.subr.mxu0 0.0
    %2273 = vmatpush1.msra.mxu0 0.0
    %2274 = vmatprep.subr.mxu0 0.0
    %2275 = vmatpush1.msra.mxu0 0.0
    %2276 = vmatprep.subr.mxu0 0.0
    %2277 = vmatpush1.msra.mxu0 0.0
    %2278 = vmatprep.subr.mxu0 0.0
    %2279 = vmatpush1.msra.mxu0 0.0
    %2280 = vmatprep.subr.mxu0 0.0
    %2281 = vmatpush1.msra.mxu0 0.0
    %2282 = vmatprep.subr.mxu0 0.0
    %2283 = vmatpush1.msra.mxu0 0.0
    %2284 = vmatprep.subr.mxu0 0.0
    %2285 = vmatpush1.msra.mxu0 0.0
    %2286 = vmatprep.subr.mxu0 0.0
    %2287 = vmatpush1.msra.mxu0 0.0
    %2288 = vmatprep.subr.mxu0 0.0
    %2289 = vmatpush1.msra.mxu0 0.0
    %2290 = vmatprep.subr.mxu0 0.0
    %2291 = vmatpush1.msra.mxu0 0.0
    %2292 = vmatprep.subr.mxu0 0.0
    %2293 = vmatpush1.msra.mxu0 0.0
    %2294 = vmatprep.subr.mxu0 0.0
    %2295 = vmatpush1.msra.mxu0 0.0
    %2296 = vmatprep.subr.mxu0 0.0
    %2297 = vmatpush1.msra.mxu0 0.0
    %2298 = vmatprep.subr.mxu0 0.0
    %2299 = vmatpush1.msra.mxu0 0.0
    %2300 = vmatprep.subr.mxu0 0.0
    %2301 = vmatpush1.msra.mxu0 0.0
    %2302 = vmatprep.subr.mxu0 0.0
    %2303 = vmatpush1.msra.mxu0 0.0
    %2304 = vmatprep.subr.mxu0 0.0
    %2305 = vmatpush1.msra.mxu0 0.0
    %2306 = vmatprep.subr.mxu0 0.0
    %2307 = vmatpush1.msra.mxu0 0.0
    %2308 = vmatprep.subr.mxu0 0.0
    %2309 = vmatpush1.msra.mxu0 0.0
    %2310 = vmatprep.subr.mxu0 0.0
    %2311 = vmatpush1.msra.mxu0 0.0
    %2312 = vmatprep.subr.mxu0 0.0
    %2313 = vmatpush1.msra.mxu0 0.0
    %2314 = vmatprep.subr.mxu0 0.0
    %2315 = vmatpush1.msra.mxu0 0.0
    %2316 = vmatprep.subr.mxu0 0.0
    %2317 = vmatpush1.msra.mxu0 0.0
    %2318 = vmatprep.subr.mxu0 0.0
    %2319 = vmatpush1.msra.mxu0 0.0
    %2320 = vmatprep.subr.mxu0 0.0
    %2321 = vmatpush1.msra.mxu0 0.0
    %2322 = vmatprep.subr.mxu0 0.0
    %2323 = vmatpush1.msra.mxu0 0.0
    %2324 = vmatprep.mubr.f32.mxu0 0.0
    %2325 = vmatmul.mubr.f32.gmra.mrb[0].mxu0 %v2255
    %v2326 = vpop.f32.mrb[0].mxu0
    %v2327 = vadd.f32 0.0, %v2326
    %v2328 = vpop.f32.mrb[0].mxu0
    %2329 = vmatprep.mubr.f32.mxu0 0.0
    %2330 = vmatmul.mubr.f32.gmra.mrb[0].mxu0 %v2258
    %v2331 = vpop.f32.mrb[0].mxu0
    %v2332 = vadd.f32 0.0, %v2331
    %v2333 = vpop.f32.mrb[0].mxu0
    %2334 = vdwg.mxu0
    %v2336 = vsel %vm194, %v1752, 0
    %v2339 = vsel %vm194, %v1757, 0
    %2341 = vmatprep.subr.mxu0 0.0
    %2342 = vmatpush1.msra.mxu0 %v1767
    %2343 = vmatprep.subr.mxu0 0.0
    %2344 = vmatpush1.msra.mxu0 0.0
    %2345 = vmatprep.subr.mxu0 0.0
    %2346 = vmatpush1.msra.mxu0 0.0
    %2347 = vmatprep.subr.mxu0 0.0
    %2348 = vmatpush1.msra.mxu0 0.0
    %2349 = vmatprep.subr.mxu0 0.0
    %2350 = vmatpush1.msra.mxu0 0.0
    %2351 = vmatprep.subr.mxu0 0.0
    %2352 = vmatpush1.msra.mxu0 0.0
    %2353 = vmatprep.subr.mxu0 0.0
    %2354 = vmatpush1.msra.mxu0 0.0
    %2355 = vmatprep.subr.mxu0 0.0
    %2356 = vmatpush1.msra.mxu0 0.0
    %2357 = vmatprep.subr.mxu0 0.0
    %2358 = vmatpush1.msra.mxu0 0.0
    %2359 = vmatprep.subr.mxu0 0.0
    %2360 = vmatpush1.msra.mxu0 0.0
    %2361 = vmatprep.subr.mxu0 0.0
    %2362 = vmatpush1.msra.mxu0 0.0
    %2363 = vmatprep.subr.mxu0 0.0
    %2364 = vmatpush1.msra.mxu0 0.0
    %2365 = vmatprep.subr.mxu0 0.0
    %2366 = vmatpush1.msra.mxu0 0.0
    %2367 = vmatprep.subr.mxu0 0.0
    %2368 = vmatpush1.msra.mxu0 0.0
    %2369 = vmatprep.subr.mxu0 0.0
    %2370 = vmatpush1.msra.mxu0 0.0
    %2371 = vmatprep.subr.mxu0 0.0
    %2372 = vmatpush1.msra.mxu0 0.0
    %2373 = vmatprep.subr.mxu0 0.0
    %2374 = vmatpush1.msra.mxu0 0.0
    %2375 = vmatprep.subr.mxu0 0.0
    %2376 = vmatpush1.msra.mxu0 0.0
    %2377 = vmatprep.subr.mxu0 0.0
    %2378 = vmatpush1.msra.mxu0 0.0
    %2379 = vmatprep.subr.mxu0 0.0
    %2380 = vmatpush1.msra.mxu0 0.0
    %2381 = vmatprep.subr.mxu0 0.0
    %2382 = vmatpush1.msra.mxu0 0.0
    %2383 = vmatprep.subr.mxu0 0.0
    %2384 = vmatpush1.msra.mxu0 0.0
    %2385 = vmatprep.subr.mxu0 0.0
    %2386 = vmatpush1.msra.mxu0 0.0
    %2387 = vmatprep.subr.mxu0 0.0
    %2388 = vmatpush1.msra.mxu0 0.0
    %2389 = vmatprep.subr.mxu0 0.0
    %2390 = vmatpush1.msra.mxu0 0.0
    %2391 = vmatprep.subr.mxu0 0.0
    %2392 = vmatpush1.msra.mxu0 0.0
    %2393 = vmatprep.subr.mxu0 0.0
    %2394 = vmatpush1.msra.mxu0 0.0
    %2395 = vmatprep.subr.mxu0 0.0
    %2396 = vmatpush1.msra.mxu0 0.0
    %2397 = vmatprep.subr.mxu0 0.0
    %2398 = vmatpush1.msra.mxu0 0.0
    %2399 = vmatprep.subr.mxu0 0.0
    %2400 = vmatpush1.msra.mxu0 0.0
    %2401 = vmatprep.subr.mxu0 0.0
    %2402 = vmatpush1.msra.mxu0 0.0
    %2403 = vmatprep.subr.mxu0 0.0
    %2404 = vmatpush1.msra.mxu0 0.0
    %2405 = vmatprep.mubr.f32.mxu0 0.0
    %2406 = vmatmul.mubr.f32.gmra.mrb[0].mxu0 %v2336
    %v2407 = vpop.f32.mrb[0].mxu0
    %v2408 = vadd.f32 0.0, %v2407
    %v2409 = vpop.f32.mrb[0].mxu0
    %2410 = vmatprep.mubr.f32.mxu0 0.0
    %2411 = vmatmul.mubr.f32.gmra.mrb[0].mxu0 %v2339
    %v2412 = vpop.f32.mrb[0].mxu0
    %v2413 = vadd.f32 0.0, %v2412
    %v2414 = vpop.f32.mrb[0].mxu0
    %2415 = vdwg.mxu0
    %v2416 = vsel %vm64, %v1841, 0.0
    %v2417 = vsel %vm64, %v2003, 0.0
    %v2418 = vadd.f32 %v2416, %v2417
    %v2419 = vsel %vm64, %v2165, 0.0
    %v2420 = vadd.f32 %v2418, %v2419
    %v2421 = vsel %vm64, %v2327, 0.0
    %v2422 = vadd.f32 %v2420, %v2421
    %v2423 = vsel %vm64, %v1846, 0.0
    %v2424 = vsel %vm64, %v2008, 0.0
    %v2425 = vadd.f32 %v2423, %v2424
    %v2426 = vsel %vm64, %v2170, 0.0
    %v2427 = vadd.f32 %v2425, %v2426
    %v2428 = vsel %vm64, %v2332, 0.0
    %v2429 = vadd.f32 %v2427, %v2428
    %v2430 = vsel %vm64, %v1922, 0.0
    %v2431 = vsel %vm64, %v2084, 0.0
    %v2432 = vadd.f32 %v2430, %v2431
    %v2433 = vsel %vm64, %v2246, 0.0
    %v2434 = vadd.f32 %v2432, %v2433
    %v2435 = vsel %vm64, %v2408, 0.0
    %v2436 = vadd.f32 %v2434, %v2435
    %v2437 = vsel %vm64, %v1927, 0.0
    %v2438 = vsel %vm64, %v2089, 0.0
    %v2439 = vadd.f32 %v2437, %v2438
    %v2440 = vsel %vm64, %v2251, 0.0
    %v2441 = vadd.f32 %v2439, %v2440
    %v2442 = vsel %vm64, %v2413, 0.0
    %v2443 = vadd.f32 %v2441, %v2442
    %2444 = vst.msk [vmem:[#allocation8] sm:$0xff] %vm64, %v2422
    %2445 = vst.msk [vmem:[#allocation8 + $0x8] sm:$0xff] %vm64, %v2429
    %2446 = vst.msk [vmem:[#allocation8 + $0x10] sm:$0xff] %vm64, %v2436
    %2447 = vst.msk [vmem:[#allocation8 + $0x18] sm:$0xff] %vm64, %v2443
    // Predicated region
    $region26: #{tpu_custom_call.1} parent=1 // pred_check
      _
    $region27: #{tpu_custom_call.1} parent=1 // pred_check_branch
      %2449 = sbr.rel (0) target = $region29
    $region28: #{tpu_custom_call.1} parent=1 // pred_region
      %s2451 = ssub.s32 512, 512
      %2452 = vsyncadd [#allocation4], %s2451
      %s2453 = sshll.u32 [#allocation8], 4
      %s2454 = int_to_ptr.vmem [resolvable:$true] %s2453
      %2459 = dma.vmem_to_hbm [thread:$0]  %s2454, 512, %s3, [#allocation4], 128, 128, 8
    $region29: #{tpu_custom_call.1} parent=1 // pred_fallthru
      _
    // Predicated region
    $region30: #{tpu_custom_call.1} parent=1 // pred_check
      _
    $region31: #{tpu_custom_call.1} parent=1 // pred_check_branch
      %2461 = sbr.rel (0) target = $region33
    $region32: #{tpu_custom_call.1} parent=1 // pred_region
      %2462 = dma.done [#allocation4], 512
    $region33: #{tpu_custom_call.1} parent=1 // pred_fallthru
      _
    %2463 = vsyncpa [#allocation3], 1
    %2464 = vsyncpa [#allocation6], 1
    %2465 = vsyncpa [#allocation4], 1

</llo_original>
